<compile_context>
chip_gen: v7x
topology: tpu7x:2x2x1
jax: 0.10.0
libtpu: 0.0.40
codegen_flags: <defaults>
</compile_context>

<pallas_src>
import functools

import jax
import jax.numpy as jnp
from jax import lax
from jax.experimental import pallas as pl
from jax.experimental.pallas import tpu as pltpu


def _round_up(x, m):
    return (x + m - 1) // m * m


def conv_bn_relu_kernel(x_ref, w_ref, scale_ref, bias_ref, o_ref, *, H, W):
    """One batch element per grid step.

    x_ref:     (1, H+2, Wp, Cin)  f32, zero-padded NHWC input tile (Wp >= W+2)
    w_ref:     (9*Cin, Coutp)     bf16, im2col-ordered weights (tap-major)
    scale_ref: (1, Coutp)         f32 folded BN scale = gamma / sqrt(var+eps)
    bias_ref:  (1, Coutp)         f32 folded BN bias  = beta + (b_conv-mean)*scale
    o_ref:     (1, H, W, Coutp)   output tile (Coutp = Cout padded to 128)
    """
    cin = x_ref.shape[-1]
    coutp = o_ref.shape[-1]

    # --- im2col: build the (H*W, 9*Cin) LHS once, then a single MXU matmul.
    # dh slices the outer dim (free); dw slices sublanes; the 9 taps are
    # concatenated along the channel (lane) dimension.
    taps = []
    for dh in range(3):
        for dw in range(3):
            taps.append(x_ref[0, dh:dh + H, dw:dw + W, :])       # (H, W, Cin)
    patch = jnp.concatenate(taps, axis=-1)                       # (H, W, 9*Cin)
    patch = patch.reshape(H * W, 9 * cin).astype(jnp.bfloat16)   # MXU-native

    acc = jnp.dot(patch, w_ref[...],                             # (H*W, Coutp)
                  preferred_element_type=jnp.float32)            # f32 accumulate

    # --- fused BN (f32) + ReLU, lane-dense store (Coutp is a multiple of 128).
    y = acc * scale_ref[0] + bias_ref[0]
    y = jnp.maximum(y, 0.0)
    o_ref[...] = y.reshape(1, H, W, coutp).astype(o_ref.dtype)


def conv_bn_relu(x_nchw, w_oihw, conv_bias, gamma, beta, run_mean, run_var,
                 eps=1e-3):
    B, Cin, H, W = x_nchw.shape
    Cout = w_oihw.shape[0]
    Coutp = _round_up(Cout, 128)     # lane-dense output / full MXU N dim
    Wp = _round_up(W + 2, 8)         # 8-aligned sublane extent of padded tile

    # --- glue (plain JAX): layout changes + BN folding ----------------------
    x_nhwc = jnp.transpose(x_nchw, (0, 2, 3, 1))
    x_pad = jnp.pad(x_nhwc, ((0, 0), (1, 1), (1, Wp - W - 1), (0, 0)))

    # OIHW -> (kh, kw, Cin, Cout) -> (9*Cin, Coutp), bf16 for the MXU.
    # K index order = (dh*3 + dw)*Cin + c, matching the in-kernel concat.
    w = jnp.transpose(w_oihw, (2, 3, 1, 0)).reshape(9 * Cin, Cout)
    w = jnp.pad(w, ((0, 0), (0, Coutp - Cout))).astype(jnp.bfloat16)

    scale_c = gamma / jnp.sqrt(run_var + eps)
    bias_c = beta + (conv_bias - run_mean) * scale_c
    scale = jnp.pad(scale_c, (0, Coutp - Cout)).reshape(1, Coutp)
    scale = scale.astype(jnp.float32)
    bias = jnp.pad(bias_c, (0, Coutp - Cout)).reshape(1, Coutp)
    bias = bias.astype(jnp.float32)

    flops = 2 * B * H * W * 9 * Cin * Coutp
    bytes_accessed = (x_pad.size * x_pad.dtype.itemsize
                      + w.size * 2 + scale.size * 4 + bias.size * 4
                      + B * H * W * Coutp * 4)

    kern = functools.partial(conv_bn_relu_kernel, H=H, W=W)
    out_nhwc = pl.pallas_call(
        kern,
        out_shape=jax.ShapeDtypeStruct((B, H, W, Coutp), x_nchw.dtype),
        grid=(B,),  # >= 2 parallel steps -> both v7x TensorCores stay busy
        in_specs=[
            pl.BlockSpec((1, H + 2, Wp, Cin), lambda b: (b, 0, 0, 0)),
            pl.BlockSpec((9 * Cin, Coutp), lambda b: (0, 0)),
            pl.BlockSpec((1, Coutp), lambda b: (0, 0)),
            pl.BlockSpec((1, Coutp), lambda b: (0, 0)),
        ],
        out_specs=pl.BlockSpec((1, H, W, Coutp), lambda b: (b, 0, 0, 0)),
        compiler_params=pltpu.CompilerParams(
            dimension_semantics=("parallel",)),
        cost_estimate=pl.CostEstimate(flops=flops, transcendentals=0,
                                      bytes_accessed=bytes_accessed),
    )(x_pad, w, scale, bias)

    out_nhwc = out_nhwc[..., :Cout]                 # drop Cout padding
    return jnp.transpose(out_nhwc, (0, 3, 1, 2))    # back to NCHW


def conv_bn_relu_reference(x_nchw, w_oihw, conv_bias, gamma, beta,
                           run_mean, run_var, eps=1e-3):
    """Pure-JAX reference matching PyTorch Conv2d(pad=1)+BN2d(eval)+ReLU."""
    y = lax.conv_general_dilated(
        x_nchw, w_oihw, window_strides=(1, 1), padding=((1, 1), (1, 1)),
        dimension_numbers=("NCHW", "OIHW", "NCHW"),
        precision=lax.Precision.HIGHEST)
    y = y + conv_bias[None, :, None, None]
    y = (y - run_mean[None, :, None, None]) / jnp.sqrt(
        run_var[None, :, None, None] + eps)
    y = y * gamma[None, :, None, None] + beta[None, :, None, None]
    return jnp.maximum(y, 0.0)


if __name__ == "__main__":
    # Small shapes consistent with the first ConvBNReLU(3, 64) of the VGG net.
    B, Cin, Cout, H, W = 2, 3, 64, 16, 16

    key = jax.random.PRNGKey(0)
    kx, kw, kb, kg, kbe, km, kv = jax.random.split(key, 7)

    x = jax.random.normal(kx, (B, Cin, H, W), jnp.float32)
    w = jax.random.normal(kw, (Cout, Cin, 3, 3), jnp.float32) * 0.1
    conv_bias = jax.random.normal(kb, (Cout,), jnp.float32) * 0.1
    gamma = 1.0 + 0.1 * jax.random.normal(kg, (Cout,), jnp.float32)
    beta = 0.1 * jax.random.normal(kbe, (Cout,), jnp.float32)
    run_mean = 0.1 * jax.random.normal(km, (Cout,), jnp.float32)
    run_var = jax.random.uniform(kv, (Cout,), jnp.float32, 0.5, 1.5)

    out = conv_bn_relu(x, w, conv_bias, gamma, beta, run_mean, run_var)
    out = jax.block_until_ready(out)
    assert out.shape == (B, Cout, H, W)

    # Tight check: reference computed with the same bf16-rounded matmul
    # operands (kernel multiplies bf16 x/w and accumulates in f32).
    x_bf = x.astype(jnp.bfloat16).astype(jnp.float32)
    w_bf = w.astype(jnp.bfloat16).astype(jnp.float32)
    ref_bf = conv_bn_relu_reference(x_bf, w_bf, conv_bias, gamma, beta,
                                    run_mean, run_var)
    err_bf = float(jnp.max(jnp.abs(out - ref_bf)))
    assert jnp.allclose(out, ref_bf, rtol=1e-3, atol=1e-3), err_bf

    # Sanity check against the full-f32 reference (loose tol for bf16 inputs).
    ref = conv_bn_relu_reference(x, w, conv_bias, gamma, beta,
                                 run_mean, run_var)
    err = float(jnp.max(jnp.abs(out - ref)))
    assert jnp.allclose(out, ref, rtol=5e-2, atol=5e-2), err

    print("KERNEL_OK")
</pallas_src>

<mosaic_0001>
module attributes {stable_mosaic.version = 11 : i64} {
  func.func @conv_bn_relu_kernel(%arg0: i32, %arg1: memref<1x18x24x3xf32, #tpu.memory_space<vmem>>, %arg2: memref<27x128xbf16, #tpu.memory_space<vmem>>, %arg3: memref<1x128xf32, #tpu.memory_space<vmem>>, %arg4: memref<1x128xf32, #tpu.memory_space<vmem>>, %arg5: memref<1x16x16x128xf32, #tpu.memory_space<vmem>>) attributes {dimension_semantics = [#tpu.dimension_semantics<parallel>], iteration_bounds = array<i64: 2>, scalar_prefetch = 0 : i64, scratch_operands = 0 : i64, tpu.core_type = #tpu.core_type<tc>, window_params = [{transform_indices = @transform_0, window_bounds = array<i64: 1, 18, 24, 3>}, {pipeline_mode = #tpu.pipeline_mode<synchronous>, transform_indices = @transform_1, window_bounds = array<i64: 27, 128>}, {pipeline_mode = #tpu.pipeline_mode<synchronous>, transform_indices = @transform_2, window_bounds = array<i64: 1, 128>}, {pipeline_mode = #tpu.pipeline_mode<synchronous>, transform_indices = @transform_3, window_bounds = array<i64: 1, 128>}, {transform_indices = @transform_4, window_bounds = array<i64: 1, 16, 16, 128>}]} {
    %c0 = arith.constant 0 : index
    %c0_0 = arith.constant 0 : index
    %c0_1 = arith.constant 0 : index
    %c0_2 = arith.constant 0 : index
    %0 = vector.load %arg1[%c0, %c0_0, %c0_1, %c0_2] : memref<1x18x24x3xf32, #tpu.memory_space<vmem>>, vector<1x16x16x3xf32>
    %1 = vector.shape_cast %0 : vector<1x16x16x3xf32> to vector<16x16x3xf32>
    %c0_3 = arith.constant 0 : index
    %c0_4 = arith.constant 0 : index
    %c1 = arith.constant 1 : index
    %c0_5 = arith.constant 0 : index
    %2 = vector.load %arg1[%c0_3, %c0_4, %c1, %c0_5] : memref<1x18x24x3xf32, #tpu.memory_space<vmem>>, vector<1x16x16x3xf32>
    %3 = vector.shape_cast %2 : vector<1x16x16x3xf32> to vector<16x16x3xf32>
    %c0_6 = arith.constant 0 : index
    %c0_7 = arith.constant 0 : index
    %c2 = arith.constant 2 : index
    %c0_8 = arith.constant 0 : index
    %4 = vector.load %arg1[%c0_6, %c0_7, %c2, %c0_8] : memref<1x18x24x3xf32, #tpu.memory_space<vmem>>, vector<1x16x16x3xf32>
    %5 = vector.shape_cast %4 : vector<1x16x16x3xf32> to vector<16x16x3xf32>
    %c0_9 = arith.constant 0 : index
    %c1_10 = arith.constant 1 : index
    %c0_11 = arith.constant 0 : index
    %c0_12 = arith.constant 0 : index
    %6 = vector.load %arg1[%c0_9, %c1_10, %c0_11, %c0_12] : memref<1x18x24x3xf32, #tpu.memory_space<vmem>>, vector<1x16x16x3xf32>
    %7 = vector.shape_cast %6 : vector<1x16x16x3xf32> to vector<16x16x3xf32>
    %c0_13 = arith.constant 0 : index
    %c1_14 = arith.constant 1 : index
    %c1_15 = arith.constant 1 : index
    %c0_16 = arith.constant 0 : index
    %8 = vector.load %arg1[%c0_13, %c1_14, %c1_15, %c0_16] : memref<1x18x24x3xf32, #tpu.memory_space<vmem>>, vector<1x16x16x3xf32>
    %9 = vector.shape_cast %8 : vector<1x16x16x3xf32> to vector<16x16x3xf32>
    %c0_17 = arith.constant 0 : index
    %c1_18 = arith.constant 1 : index
    %c2_19 = arith.constant 2 : index
    %c0_20 = arith.constant 0 : index
    %10 = vector.load %arg1[%c0_17, %c1_18, %c2_19, %c0_20] : memref<1x18x24x3xf32, #tpu.memory_space<vmem>>, vector<1x16x16x3xf32>
    %11 = vector.shape_cast %10 : vector<1x16x16x3xf32> to vector<16x16x3xf32>
    %c0_21 = arith.constant 0 : index
    %c2_22 = arith.constant 2 : index
    %c0_23 = arith.constant 0 : index
    %c0_24 = arith.constant 0 : index
    %12 = vector.load %arg1[%c0_21, %c2_22, %c0_23, %c0_24] : memref<1x18x24x3xf32, #tpu.memory_space<vmem>>, vector<1x16x16x3xf32>
    %13 = vector.shape_cast %12 : vector<1x16x16x3xf32> to vector<16x16x3xf32>
    %c0_25 = arith.constant 0 : index
    %c2_26 = arith.constant 2 : index
    %c1_27 = arith.constant 1 : index
    %c0_28 = arith.constant 0 : index
    %14 = vector.load %arg1[%c0_25, %c2_26, %c1_27, %c0_28] : memref<1x18x24x3xf32, #tpu.memory_space<vmem>>, vector<1x16x16x3xf32>
    %15 = vector.shape_cast %14 : vector<1x16x16x3xf32> to vector<16x16x3xf32>
    %c0_29 = arith.constant 0 : index
    %c2_30 = arith.constant 2 : index
    %c2_31 = arith.constant 2 : index
    %c0_32 = arith.constant 0 : index
    %16 = vector.load %arg1[%c0_29, %c2_30, %c2_31, %c0_32] : memref<1x18x24x3xf32, #tpu.memory_space<vmem>>, vector<1x16x16x3xf32>
    %17 = vector.shape_cast %16 : vector<1x16x16x3xf32> to vector<16x16x3xf32>
    %18 = tpu.concatenate %1, %3, %5, %7, %9, %11, %13, %15, %17 in 2 : vector<16x16x3xf32>, vector<16x16x3xf32>, vector<16x16x3xf32>, vector<16x16x3xf32>, vector<16x16x3xf32>, vector<16x16x3xf32>, vector<16x16x3xf32>, vector<16x16x3xf32>, vector<16x16x3xf32> -> vector<16x16x27xf32>
    %19 = vector.shape_cast %18 : vector<16x16x27xf32> to vector<256x27xf32>
    %20 = arith.truncf %19 : vector<256x27xf32> to vector<256x27xbf16>
    %c0_33 = arith.constant 0 : index
    %c0_34 = arith.constant 0 : index
    %21 = vector.load %arg2[%c0_33, %c0_34] : memref<27x128xbf16, #tpu.memory_space<vmem>>, vector<27x128xbf16>
    %cst = arith.constant dense<0.000000e+00> : vector<256x128xf32>
    %22 = tpu.matmul %20, %21, %cst {dimension_numbers = #tpu.dot_dimension_numbers<[1], [0], [0], [1], [0, 0, 1, 1], [], []>} : vector<256x27xbf16>, vector<27x128xbf16>, vector<256x128xf32> -> vector<256x128xf32>
    %c0_35 = arith.constant 0 : index
    %c0_36 = arith.constant 0 : index
    %23 = vector.load %arg3[%c0_35, %c0_36] : memref<1x128xf32, #tpu.memory_space<vmem>>, vector<1x128xf32>
    %24 = vector.shape_cast %23 : vector<1x128xf32> to vector<128xf32>
    %25 = vector.shape_cast %24 : vector<128xf32> to vector<1x128xf32>
    %26 = vector.broadcast %25 : vector<1x128xf32> to vector<256x128xf32>
    %27 = arith.mulf %22, %26 : vector<256x128xf32>
    %c0_37 = arith.constant 0 : index
    %c0_38 = arith.constant 0 : index
    %28 = vector.load %arg4[%c0_37, %c0_38] : memref<1x128xf32, #tpu.memory_space<vmem>>, vector<1x128xf32>
    %29 = vector.shape_cast %28 : vector<1x128xf32> to vector<128xf32>
    %30 = vector.shape_cast %29 : vector<128xf32> to vector<1x128xf32>
    %31 = vector.broadcast %30 : vector<1x128xf32> to vector<256x128xf32>
    %32 = arith.addf %27, %31 : vector<256x128xf32>
    %cst_39 = arith.constant 0.000000e+00 : f32
    %33 = vector.broadcast %cst_39 : f32 to vector<256x128xf32>
    %34 = arith.maximumf %32, %33 : vector<256x128xf32>
    %35 = vector.shape_cast %34 : vector<256x128xf32> to vector<1x16x16x128xf32>
    %c0_40 = arith.constant 0 : index
    %c0_41 = arith.constant 0 : index
    %c0_42 = arith.constant 0 : index
    %c0_43 = arith.constant 0 : index
    %36 = vector.load %arg5[%c0_40, %c0_41, %c0_42, %c0_43] : memref<1x16x16x128xf32, #tpu.memory_space<vmem>>, vector<1x16x16x128xf32>
    tpu.vector_store %arg5[%c0_40, %c0_41, %c0_42, %c0_43], %35 {strides = array<i32>} : memref<1x16x16x128xf32, #tpu.memory_space<vmem>>, vector<1x16x16x128xf32>,
    return
  }
  func.func @transform_0(%arg0: i32) -> (i32, i32, i32, i32) {
    %c0_i32 = arith.constant 0 : i32
    %c0_i32_0 = arith.constant 0 : i32
    %c0_i32_1 = arith.constant 0 : i32
    %c0_i32_2 = arith.constant 0 : i32
    return %arg0, %c0_i32, %c0_i32_0, %c0_i32_1 : i32, i32, i32, i32
  }
  func.func @transform_1(%arg0: i32) -> (i32, i32) {
    %c0_i32 = arith.constant 0 : i32
    %c0_i32_0 = arith.constant 0 : i32
    %c0_i32_1 = arith.constant 0 : i32
    return %c0_i32, %c0_i32_0 : i32, i32
  }
  func.func @transform_2(%arg0: i32) -> (i32, i32) {
    %c0_i32 = arith.constant 0 : i32
    %c0_i32_0 = arith.constant 0 : i32
    %c0_i32_1 = arith.constant 0 : i32
    return %c0_i32, %c0_i32_0 : i32, i32
  }
  func.func @transform_3(%arg0: i32) -> (i32, i32) {
    %c0_i32 = arith.constant 0 : i32
    %c0_i32_0 = arith.constant 0 : i32
    %c0_i32_1 = arith.constant 0 : i32
    return %c0_i32, %c0_i32_0 : i32, i32
  }
  func.func @transform_4(%arg0: i32) -> (i32, i32, i32, i32) {
    %c0_i32 = arith.constant 0 : i32
    %c0_i32_0 = arith.constant 0 : i32
    %c0_i32_1 = arith.constant 0 : i32
    %c0_i32_2 = arith.constant 0 : i32
    return %arg0, %c0_i32, %c0_i32_0, %c0_i32_1 : i32, i32, i32, i32
  }
}

</mosaic_0001>

<llo_original>
// kernel: tpu_custom_call.1
$region0: #{tpu_custom_call.1}
  #allocation0 [shape = 'u32[]', space=smem, size = 0x4, offset = 0x4, fixed_abs, tag = 'smem constant byte address 0x4 - core index']
  #allocation1 [shape = 'u32[144,128]{1,0:T(1,128)}', space=vmem, size = 0x12000, scoped, tag = 'internal scratch']
  %s0 = inlined_call_operand.vmem [shape: f32[2,18,24,3], index: 0, kind: input, shape index: {}]
  %s1 = inlined_call_operand.vmem [shape: bf16[27,128], index: 1, kind: input, shape index: {}]
  %s2 = inlined_call_operand.vmem [shape: f32[1,128], index: 2, kind: input, shape index: {}]
  %s3 = inlined_call_operand.vmem [shape: f32[1,128], index: 3, kind: input, shape index: {}]
  %s4 = inlined_call_operand.hbm [shape: f32[2,16,16,128], index: 4, kind: output, shape index: {}]
  %s5 = sld [smem:[#allocation0]]
  $region49: #{tpu_custom_call.1} parent=0
    _
  %s7 = ssub.s32 1, %s5
  %s8 = scalar_select 0, %s7, %s5
  $region1: #{tpu_custom_call.1} parent=0
    #allocation2 [shape = 'u8[262144]{0}', space=vmem, size = 0x40000, scoped, tag = 'output window, operand 0']
    #allocation3 [shape = 's32[2]{0}', space=sflag, size = 0x8, scoped, tag = 'scoped memory for tpu_custom_call.1']
    %9 = vsyncpa [#allocation3], 0
    %s10 = scalar_lea.sflag [#allocation3], 1
    %11 = vsyncpa %s10, 0
    loop: start=0, step=1, limit=4
    $region2: #{tpu_custom_call.1} parent=1 // loop_pre_header
      _
    $region3: #{tpu_custom_call.1} parent=1 // loop_header
      %s13 = sphi 0, %s17
      %p14 = scmp.ge.s32.totalorder %s13, 4
      %s23 = sphi 0, %s25
      %s26 = sphi 0, %s23
      %s27 = sphi 0, %s26
      %s43 = sphi 0, %s27
      %s47 = sphi 0, %s47
      %s49 = sphi 0, %s47
      %s50 = sphi 0, %s49
      %s64 = sphi 0, %s50
      %s68 = sphi 0, %s68
      %s70 = sphi 0, %s68
      %s71 = sphi 0, %s70
      %s85 = sphi 0, %s71
      %s89 = sphi 0, %s89
      %s91 = sphi 0, %s89
      %s92 = sphi 0, %s91
      %s106 = sphi 0, %s92
      %s112 = sphi 0, %s114
      %s115 = sphi 0, %s112
      %s116 = sphi 0, %s115
      %s132 = sphi 0, %s116
    $region4: #{tpu_custom_call.1} parent=1 // loop_header_branch
      %16 = sbr.rel (%p14) target = $region8
    $region5: #{tpu_custom_call.1} parent=1 // loop_body
      %s18 = ssub.s32 %s13, 1
      %s19 = ssub.s32 %s13, 2
      %s20 = sadd.s32 %s13, 1
      %s21 = ssub.s32 %s13, %s20
      %p22 = scmp.eq.s32.totalorder %s21, 0
      %s24 = sadd.s32 %s23, 1
      %s25 = scalar_select %p22, %s23, %s24
      %p28 = pneg %p22
      %p29 = scmp.eq.s32.totalorder %s13, 1
      %p30 = por %p28, %p29
      %p31 = scmp.ne.s32.totalorder %s23, %s26
      %p32 = scmp.eq.s32.totalorder %s13, 0
      %p33 = por %p31, %p32
      %p34 = scmp.ne.s32.totalorder %s23, %s26
      %p35 = scmp.eq.s32.totalorder %s18, 1
      %p36 = por %p34, %p35
      %p37 = scmp.ne.s32.totalorder %s26, %s27
      %p38 = scmp.eq.s32.totalorder %s18, 0
      %p39 = por %p37, %p38
      %p40 = scmp.ne.s32.totalorder %s26, %s27
      %p41 = scmp.eq.s32.totalorder %s19, 1
      %p42 = por %p40, %p41
      %p44 = scmp.ne.s32.totalorder %s27, %s43
      %p45 = scmp.eq.s32.totalorder %s19, 0
      %p46 = por %p44, %p45
      %s48 = sadd.s32 %s47, 1
      %p51 = scmp.eq.s32.totalorder %s13, 1
      %p52 = scmp.ne.s32.totalorder %s47, %s49
      %p53 = scmp.eq.s32.totalorder %s13, 0
      %p54 = por %p52, %p53
      %p55 = scmp.ne.s32.totalorder %s47, %s49
      %p56 = scmp.eq.s32.totalorder %s18, 1
      %p57 = por %p55, %p56
      %p58 = scmp.ne.s32.totalorder %s49, %s50
      %p59 = scmp.eq.s32.totalorder %s18, 0
      %p60 = por %p58, %p59
      %p61 = scmp.ne.s32.totalorder %s49, %s50
      %p62 = scmp.eq.s32.totalorder %s19, 1
      %p63 = por %p61, %p62
      %p65 = scmp.ne.s32.totalorder %s50, %s64
      %p66 = scmp.eq.s32.totalorder %s19, 0
      %p67 = por %p65, %p66
      %s69 = sadd.s32 %s68, 1
      %p72 = scmp.eq.s32.totalorder %s13, 1
      %p73 = scmp.ne.s32.totalorder %s68, %s70
      %p74 = scmp.eq.s32.totalorder %s13, 0
      %p75 = por %p73, %p74
      %p76 = scmp.ne.s32.totalorder %s68, %s70
      %p77 = scmp.eq.s32.totalorder %s18, 1
      %p78 = por %p76, %p77
      %p79 = scmp.ne.s32.totalorder %s70, %s71
      %p80 = scmp.eq.s32.totalorder %s18, 0
      %p81 = por %p79, %p80
      %p82 = scmp.ne.s32.totalorder %s70, %s71
      %p83 = scmp.eq.s32.totalorder %s19, 1
      %p84 = por %p82, %p83
      %p86 = scmp.ne.s32.totalorder %s71, %s85
      %p87 = scmp.eq.s32.totalorder %s19, 0
      %p88 = por %p86, %p87
      %s90 = sadd.s32 %s89, 1
      %p93 = scmp.eq.s32.totalorder %s13, 1
      %p94 = scmp.ne.s32.totalorder %s89, %s91
      %p95 = scmp.eq.s32.totalorder %s13, 0
      %p96 = por %p94, %p95
      %p97 = scmp.ne.s32.totalorder %s89, %s91
      %p98 = scmp.eq.s32.totalorder %s18, 1
      %p99 = por %p97, %p98
      %p100 = scmp.ne.s32.totalorder %s91, %s92
      %p101 = scmp.eq.s32.totalorder %s18, 0
      %p102 = por %p100, %p101
      %p103 = scmp.ne.s32.totalorder %s91, %s92
      %p104 = scmp.eq.s32.totalorder %s19, 1
      %p105 = por %p103, %p104
      %p107 = scmp.ne.s32.totalorder %s92, %s106
      %p108 = scmp.eq.s32.totalorder %s19, 0
      %p109 = por %p107, %p108
      %s110 = ssub.s32 %s13, %s20
      %p111 = scmp.eq.s32.totalorder %s110, 0
      %s113 = sadd.s32 %s112, 1
      %s114 = scalar_select %p111, %s112, %s113
      %p117 = pneg %p111
      %p118 = scmp.eq.s32.totalorder %s13, 1
      %p119 = por %p117, %p118
      %p120 = scmp.ne.s32.totalorder %s112, %s115
      %p121 = scmp.eq.s32.totalorder %s13, 0
      %p122 = por %p120, %p121
      %p123 = scmp.ne.s32.totalorder %s112, %s115
      %p124 = scmp.eq.s32.totalorder %s18, 1
      %p125 = por %p123, %p124
      %p126 = scmp.ne.s32.totalorder %s115, %s116
      %p127 = scmp.eq.s32.totalorder %s18, 0
      %p128 = por %p126, %p127
      %p129 = scmp.ne.s32.totalorder %s115, %s116
      %p130 = scmp.eq.s32.totalorder %s19, 1
      %p131 = por %p129, %p130
      %p133 = scmp.ne.s32.totalorder %s116, %s132
      %p134 = scmp.eq.s32.totalorder %s19, 0
      %p135 = por %p133, %p134
      %p136 = scmp.le.s32.totalorder 1, %s13
      %p137 = scmp.lt.s32.totalorder %s13, 3
      %p138 = pnand %p136, %p137
      %p139 = pneg %p138
      // Predicated region
      $region9: #{tpu_custom_call.1} parent=5 // pred_check
        _
      $region10: #{tpu_custom_call.1} parent=5 // pred_check_branch
        %141 = sbr.rel (%p138) target = $region12
      $region11: #{tpu_custom_call.1} parent=5 // pred_region
        %s142 = ssub.s32 %s13, 1
        // Predicated region
        $region13: #{tpu_custom_call.1} parent=11 // pred_check
          %p143 = pneg %p60
        $region14: #{tpu_custom_call.1} parent=11 // pred_check_branch
          %145 = sbr.rel (%p143) target = $region16
        $region15: #{tpu_custom_call.1} parent=11 // pred_region
          _
        $region16: #{tpu_custom_call.1} parent=11 // pred_fallthru
          _
        // Predicated region
        $region17: #{tpu_custom_call.1} parent=11 // pred_check
          %p146 = pneg %p81
        $region18: #{tpu_custom_call.1} parent=11 // pred_check_branch
          %148 = sbr.rel (%p146) target = $region20
        $region19: #{tpu_custom_call.1} parent=11 // pred_region
          _
        $region20: #{tpu_custom_call.1} parent=11 // pred_fallthru
          _
        // Predicated region
        $region21: #{tpu_custom_call.1} parent=11 // pred_check
          %p149 = pneg %p102
        $region22: #{tpu_custom_call.1} parent=11 // pred_check_branch
          %151 = sbr.rel (%p149) target = $region24
        $region23: #{tpu_custom_call.1} parent=11 // pred_region
          _
        $region24: #{tpu_custom_call.1} parent=11 // pred_fallthru
          _
      $region12: #{tpu_custom_call.1} parent=5 // pred_fallthru
        _
      %p152 = scmp.lt.s32.totalorder %s13, 2
      // Predicated region
      $region25: #{tpu_custom_call.1} parent=5 // pred_check
        %p153 = pneg %p152
      $region26: #{tpu_custom_call.1} parent=5 // pred_check_branch
        %155 = sbr.rel (%p153) target = $region28
      $region27: #{tpu_custom_call.1} parent=5 // pred_region
        // Predicated region
        $region29: #{tpu_custom_call.1} parent=27 // pred_check
          %p156 = pneg %p33
        $region30: #{tpu_custom_call.1} parent=27 // pred_check_branch
          %158 = sbr.rel (%p156) target = $region32
        $region31: #{tpu_custom_call.1} parent=27 // pred_region
          %p159 = scmp.lt.s32.totalorder %s13, 1
          %s160 = scalar_select %p159, %s13, 1
          %s161 = smul.addr %s160, 54
          %s162 = smul.addr %s161, 8
          %s163 = scalar_lea.vmem %s0, %s162
        $region32: #{tpu_custom_call.1} parent=27 // pred_fallthru
          _
      $region28: #{tpu_custom_call.1} parent=5 // pred_fallthru
        _
      %p164 = scmp.le.s32.totalorder 1, %s13
      %p165 = scmp.lt.s32.totalorder %s13, 3
      %p166 = pnand %p164, %p165
      %p167 = pneg %p166
      // Predicated region
      $region33: #{tpu_custom_call.1} parent=5 // pred_check
        _
      $region34: #{tpu_custom_call.1} parent=5 // pred_check_branch
        %169 = sbr.rel (%p166) target = $region36
      $region35: #{tpu_custom_call.1} parent=5 // pred_region
        %s170 = ssub.s32 %s13, 1
        %p171 = scmp.lt.s32.totalorder %s18, 1
        %s172 = scalar_select %p171, %s18, 1
        %s173 = smul.addr %s172, 54
        %s174 = smul.addr %s173, 8
        %s175 = scalar_lea.vmem %s0, %s174
        %p176 = pneg %p39
        %p177 = pneg %p36
        %p178 = pneg %p60
        %p179 = pneg %p57
        %p180 = pneg %p81
        %p181 = pneg %p78
        %p182 = pneg %p102
        %p183 = pneg %p99
        %p184 = pneg %p128
        %p185 = pneg %p125
        %s186 = sand.u32 %s115, 1
        %s187 = scalar_lea.sflag [#allocation3], %s186
        %s188 = sand.u32 %s115, 1
        %s189 = smul.addr %s188, 256
        %s190 = scalar_lea.vmem [#allocation2], %s189
        %p191 = scmp.lt.s32.totalorder %s18, 1
        %s192 = scalar_select %p191, %s18, 1
        %s193 = smul.addr %s192, 54
        %s194 = smul.addr %s193, 8
        %s195 = scalar_lea.vmem %s0, %s194
        %v197 = vld [vmem:[%s195] sm:$0xff]
        %v198 = vld [vmem:[%s195 + $0x8] sm:$0xff]
        %v199 = vld [vmem:[%s195 + $0x18] sm:$0xff]
        %v200 = vld [vmem:[%s195 + $0x20] sm:$0xff]
        %v201 = vld [vmem:[%s195 + $0x30] sm:$0xff]
        %v202 = vld [vmem:[%s195 + $0x38] sm:$0xff]
        %v203 = vld [vmem:[%s195 + $0x48] sm:$0xff]
        %v204 = vld [vmem:[%s195 + $0x50] sm:$0xff]
        %v205 = vld [vmem:[%s195 + $0x60] sm:$0xff]
        %v206 = vld [vmem:[%s195 + $0x68] sm:$0xff]
        %v207 = vld [vmem:[%s195 + $0x78] sm:$0xff]
        %v208 = vld [vmem:[%s195 + $0x80] sm:$0xff]
        %v209 = vld [vmem:[%s195 + $0x90] sm:$0xff]
        %v210 = vld [vmem:[%s195 + $0x98] sm:$0xff]
        %v211 = vld [vmem:[%s195 + $0xa8] sm:$0xff]
        %v212 = vld [vmem:[%s195 + $0xb0] sm:$0xff]
        %v213 = vld [vmem:[%s195 + $0xc0] sm:$0xff]
        %v214 = vld [vmem:[%s195 + $0xc8] sm:$0xff]
        %v215 = vld [vmem:[%s195 + $0xd8] sm:$0xff]
        %v216 = vld [vmem:[%s195 + $0xe0] sm:$0xff]
        %v217 = vld [vmem:[%s195 + $0xf0] sm:$0xff]
        %v218 = vld [vmem:[%s195 + $0xf8] sm:$0xff]
        %v219 = vld [vmem:[%s195 + $0x108] sm:$0xff]
        %v220 = vld [vmem:[%s195 + $0x110] sm:$0xff]
        %v221 = vld [vmem:[%s195 + $0x120] sm:$0xff]
        %v222 = vld [vmem:[%s195 + $0x128] sm:$0xff]
        %v223 = vld [vmem:[%s195 + $0x138] sm:$0xff]
        %v224 = vld [vmem:[%s195 + $0x140] sm:$0xff]
        %v225 = vld [vmem:[%s195 + $0x150] sm:$0xff]
        %v226 = vld [vmem:[%s195 + $0x158] sm:$0xff]
        %v227 = vld [vmem:[%s195 + $0x168] sm:$0xff]
        %v228 = vld [vmem:[%s195 + $0x170] sm:$0xff]
        %v229 = vld [vmem:[%s195 + $0x1] sm:$0xff]
        %v230 = vld [vmem:[%s195 + $0x9] sm:$0xff]
        %v231 = vld [vmem:[%s195 + $0x19] sm:$0xff]
        %v232 = vld [vmem:[%s195 + $0x21] sm:$0xff]
        %v233 = vld [vmem:[%s195 + $0x31] sm:$0xff]
        %v234 = vld [vmem:[%s195 + $0x39] sm:$0xff]
        %v235 = vld [vmem:[%s195 + $0x49] sm:$0xff]
        %v236 = vld [vmem:[%s195 + $0x51] sm:$0xff]
        %v237 = vld [vmem:[%s195 + $0x61] sm:$0xff]
        %v238 = vld [vmem:[%s195 + $0x69] sm:$0xff]
        %v239 = vld [vmem:[%s195 + $0x79] sm:$0xff]
        %v240 = vld [vmem:[%s195 + $0x81] sm:$0xff]
        %v241 = vld [vmem:[%s195 + $0x91] sm:$0xff]
        %v242 = vld [vmem:[%s195 + $0x99] sm:$0xff]
        %v243 = vld [vmem:[%s195 + $0xa9] sm:$0xff]
        %v244 = vld [vmem:[%s195 + $0xb1] sm:$0xff]
        %v245 = vld [vmem:[%s195 + $0xc1] sm:$0xff]
        %v246 = vld [vmem:[%s195 + $0xc9] sm:$0xff]
        %v247 = vld [vmem:[%s195 + $0xd9] sm:$0xff]
        %v248 = vld [vmem:[%s195 + $0xe1] sm:$0xff]
        %v249 = vld [vmem:[%s195 + $0xf1] sm:$0xff]
        %v250 = vld [vmem:[%s195 + $0xf9] sm:$0xff]
        %v251 = vld [vmem:[%s195 + $0x109] sm:$0xff]
        %v252 = vld [vmem:[%s195 + $0x111] sm:$0xff]
        %v253 = vld [vmem:[%s195 + $0x121] sm:$0xff]
        %v254 = vld [vmem:[%s195 + $0x129] sm:$0xff]
        %v255 = vld [vmem:[%s195 + $0x139] sm:$0xff]
        %v256 = vld [vmem:[%s195 + $0x141] sm:$0xff]
        %v257 = vld [vmem:[%s195 + $0x151] sm:$0xff]
        %v258 = vld [vmem:[%s195 + $0x159] sm:$0xff]
        %v259 = vld [vmem:[%s195 + $0x169] sm:$0xff]
        %v260 = vld [vmem:[%s195 + $0x171] sm:$0xff]
        %v261 = vld [vmem:[%s195 + $0x2] sm:$0xff]
        %v262 = vld [vmem:[%s195 + $0xa] sm:$0xff]
        %v263 = vld [vmem:[%s195 + $0x1a] sm:$0xff]
        %v264 = vld [vmem:[%s195 + $0x22] sm:$0xff]
        %v265 = vld [vmem:[%s195 + $0x32] sm:$0xff]
        %v266 = vld [vmem:[%s195 + $0x3a] sm:$0xff]
        %v267 = vld [vmem:[%s195 + $0x4a] sm:$0xff]
        %v268 = vld [vmem:[%s195 + $0x52] sm:$0xff]
        %v269 = vld [vmem:[%s195 + $0x62] sm:$0xff]
        %v270 = vld [vmem:[%s195 + $0x6a] sm:$0xff]
        %v271 = vld [vmem:[%s195 + $0x7a] sm:$0xff]
        %v272 = vld [vmem:[%s195 + $0x82] sm:$0xff]
        %v273 = vld [vmem:[%s195 + $0x92] sm:$0xff]
        %v274 = vld [vmem:[%s195 + $0x9a] sm:$0xff]
        %v275 = vld [vmem:[%s195 + $0xaa] sm:$0xff]
        %v276 = vld [vmem:[%s195 + $0xb2] sm:$0xff]
        %v277 = vld [vmem:[%s195 + $0xc2] sm:$0xff]
        %v278 = vld [vmem:[%s195 + $0xca] sm:$0xff]
        %v279 = vld [vmem:[%s195 + $0xda] sm:$0xff]
        %v280 = vld [vmem:[%s195 + $0xe2] sm:$0xff]
        %v281 = vld [vmem:[%s195 + $0xf2] sm:$0xff]
        %v282 = vld [vmem:[%s195 + $0xfa] sm:$0xff]
        %v283 = vld [vmem:[%s195 + $0x10a] sm:$0xff]
        %v284 = vld [vmem:[%s195 + $0x112] sm:$0xff]
        %v285 = vld [vmem:[%s195 + $0x122] sm:$0xff]
        %v286 = vld [vmem:[%s195 + $0x12a] sm:$0xff]
        %v287 = vld [vmem:[%s195 + $0x13a] sm:$0xff]
        %v288 = vld [vmem:[%s195 + $0x142] sm:$0xff]
        %v289 = vld [vmem:[%s195 + $0x152] sm:$0xff]
        %v290 = vld [vmem:[%s195 + $0x15a] sm:$0xff]
        %v291 = vld [vmem:[%s195 + $0x16a] sm:$0xff]
        %v292 = vld [vmem:[%s195 + $0x172] sm:$0xff]
        %s293 = scalar_lea.vmem %s195, 24
        %v294 = vld [vmem:[%s293] sm:$0xff]
        %v295 = vld [vmem:[%s293 + $0x8] sm:$0xff]
        %v296 = vld [vmem:[%s293 + $0x18] sm:$0xff]
        %v297 = vld [vmem:[%s293 + $0x20] sm:$0xff]
        %v298 = vld [vmem:[%s293 + $0x30] sm:$0xff]
        %v299 = vld [vmem:[%s293 + $0x38] sm:$0xff]
        %v300 = vld [vmem:[%s293 + $0x48] sm:$0xff]
        %v301 = vld [vmem:[%s293 + $0x50] sm:$0xff]
        %v302 = vld [vmem:[%s293 + $0x60] sm:$0xff]
        %v303 = vld [vmem:[%s293 + $0x68] sm:$0xff]
        %v304 = vld [vmem:[%s293 + $0x78] sm:$0xff]
        %v305 = vld [vmem:[%s293 + $0x80] sm:$0xff]
        %v306 = vld [vmem:[%s293 + $0x90] sm:$0xff]
        %v307 = vld [vmem:[%s293 + $0x98] sm:$0xff]
        %v308 = vld [vmem:[%s293 + $0xa8] sm:$0xff]
        %v309 = vld [vmem:[%s293 + $0xb0] sm:$0xff]
        %v310 = vld [vmem:[%s293 + $0xc0] sm:$0xff]
        %v311 = vld [vmem:[%s293 + $0xc8] sm:$0xff]
        %v312 = vld [vmem:[%s293 + $0xd8] sm:$0xff]
        %v313 = vld [vmem:[%s293 + $0xe0] sm:$0xff]
        %v314 = vld [vmem:[%s293 + $0xf0] sm:$0xff]
        %v315 = vld [vmem:[%s293 + $0xf8] sm:$0xff]
        %v316 = vld [vmem:[%s293 + $0x108] sm:$0xff]
        %v317 = vld [vmem:[%s293 + $0x110] sm:$0xff]
        %v318 = vld [vmem:[%s293 + $0x120] sm:$0xff]
        %v319 = vld [vmem:[%s293 + $0x128] sm:$0xff]
        %v320 = vld [vmem:[%s293 + $0x138] sm:$0xff]
        %v321 = vld [vmem:[%s293 + $0x140] sm:$0xff]
        %v322 = vld [vmem:[%s293 + $0x150] sm:$0xff]
        %v323 = vld [vmem:[%s293 + $0x158] sm:$0xff]
        %v324 = vld [vmem:[%s293 + $0x168] sm:$0xff]
        %v325 = vld [vmem:[%s293 + $0x170] sm:$0xff]
        %v326 = vld [vmem:[%s293 + $0x1] sm:$0xff]
        %v327 = vld [vmem:[%s293 + $0x9] sm:$0xff]
        %v328 = vld [vmem:[%s293 + $0x19] sm:$0xff]
        %v329 = vld [vmem:[%s293 + $0x21] sm:$0xff]
        %v330 = vld [vmem:[%s293 + $0x31] sm:$0xff]
        %v331 = vld [vmem:[%s293 + $0x39] sm:$0xff]
        %v332 = vld [vmem:[%s293 + $0x49] sm:$0xff]
        %v333 = vld [vmem:[%s293 + $0x51] sm:$0xff]
        %v334 = vld [vmem:[%s293 + $0x61] sm:$0xff]
        %v335 = vld [vmem:[%s293 + $0x69] sm:$0xff]
        %v336 = vld [vmem:[%s293 + $0x79] sm:$0xff]
        %v337 = vld [vmem:[%s293 + $0x81] sm:$0xff]
        %v338 = vld [vmem:[%s293 + $0x91] sm:$0xff]
        %v339 = vld [vmem:[%s293 + $0x99] sm:$0xff]
        %v340 = vld [vmem:[%s293 + $0xa9] sm:$0xff]
        %v341 = vld [vmem:[%s293 + $0xb1] sm:$0xff]
        %v342 = vld [vmem:[%s293 + $0xc1] sm:$0xff]
        %v343 = vld [vmem:[%s293 + $0xc9] sm:$0xff]
        %v344 = vld [vmem:[%s293 + $0xd9] sm:$0xff]
        %v345 = vld [vmem:[%s293 + $0xe1] sm:$0xff]
        %v346 = vld [vmem:[%s293 + $0xf1] sm:$0xff]
        %v347 = vld [vmem:[%s293 + $0xf9] sm:$0xff]
        %v348 = vld [vmem:[%s293 + $0x109] sm:$0xff]
        %v349 = vld [vmem:[%s293 + $0x111] sm:$0xff]
        %v350 = vld [vmem:[%s293 + $0x121] sm:$0xff]
        %v351 = vld [vmem:[%s293 + $0x129] sm:$0xff]
        %v352 = vld [vmem:[%s293 + $0x139] sm:$0xff]
        %v353 = vld [vmem:[%s293 + $0x141] sm:$0xff]
        %v354 = vld [vmem:[%s293 + $0x151] sm:$0xff]
        %v355 = vld [vmem:[%s293 + $0x159] sm:$0xff]
        %v356 = vld [vmem:[%s293 + $0x169] sm:$0xff]
        %v357 = vld [vmem:[%s293 + $0x171] sm:$0xff]
        %v358 = vld [vmem:[%s293 + $0x2] sm:$0xff]
        %v359 = vld [vmem:[%s293 + $0xa] sm:$0xff]
        %v360 = vld [vmem:[%s293 + $0x1a] sm:$0xff]
        %v361 = vld [vmem:[%s293 + $0x22] sm:$0xff]
        %v362 = vld [vmem:[%s293 + $0x32] sm:$0xff]
        %v363 = vld [vmem:[%s293 + $0x3a] sm:$0xff]
        %v364 = vld [vmem:[%s293 + $0x4a] sm:$0xff]
        %v365 = vld [vmem:[%s293 + $0x52] sm:$0xff]
        %v366 = vld [vmem:[%s293 + $0x62] sm:$0xff]
        %v367 = vld [vmem:[%s293 + $0x6a] sm:$0xff]
        %v368 = vld [vmem:[%s293 + $0x7a] sm:$0xff]
        %v369 = vld [vmem:[%s293 + $0x82] sm:$0xff]
        %v370 = vld [vmem:[%s293 + $0x92] sm:$0xff]
        %v371 = vld [vmem:[%s293 + $0x9a] sm:$0xff]
        %v372 = vld [vmem:[%s293 + $0xaa] sm:$0xff]
        %v373 = vld [vmem:[%s293 + $0xb2] sm:$0xff]
        %v374 = vld [vmem:[%s293 + $0xc2] sm:$0xff]
        %v375 = vld [vmem:[%s293 + $0xca] sm:$0xff]
        %v376 = vld [vmem:[%s293 + $0xda] sm:$0xff]
        %v377 = vld [vmem:[%s293 + $0xe2] sm:$0xff]
        %v378 = vld [vmem:[%s293 + $0xf2] sm:$0xff]
        %v379 = vld [vmem:[%s293 + $0xfa] sm:$0xff]
        %v380 = vld [vmem:[%s293 + $0x10a] sm:$0xff]
        %v381 = vld [vmem:[%s293 + $0x112] sm:$0xff]
        %v382 = vld [vmem:[%s293 + $0x122] sm:$0xff]
        %v383 = vld [vmem:[%s293 + $0x12a] sm:$0xff]
        %v384 = vld [vmem:[%s293 + $0x13a] sm:$0xff]
        %v385 = vld [vmem:[%s293 + $0x142] sm:$0xff]
        %v386 = vld [vmem:[%s293 + $0x152] sm:$0xff]
        %v387 = vld [vmem:[%s293 + $0x15a] sm:$0xff]
        %v388 = vld [vmem:[%s293 + $0x16a] sm:$0xff]
        %v389 = vld [vmem:[%s293 + $0x172] sm:$0xff]
        %s390 = scalar_lea.vmem %s195, 48
        %v391 = vld [vmem:[%s390] sm:$0xff]
        %v392 = vld [vmem:[%s390 + $0x8] sm:$0xff]
        %v393 = vld [vmem:[%s390 + $0x18] sm:$0xff]
        %v394 = vld [vmem:[%s390 + $0x20] sm:$0xff]
        %v395 = vld [vmem:[%s390 + $0x30] sm:$0xff]
        %v396 = vld [vmem:[%s390 + $0x38] sm:$0xff]
        %v397 = vld [vmem:[%s390 + $0x48] sm:$0xff]
        %v398 = vld [vmem:[%s390 + $0x50] sm:$0xff]
        %v399 = vld [vmem:[%s390 + $0x60] sm:$0xff]
        %v400 = vld [vmem:[%s390 + $0x68] sm:$0xff]
        %v401 = vld [vmem:[%s390 + $0x78] sm:$0xff]
        %v402 = vld [vmem:[%s390 + $0x80] sm:$0xff]
        %v403 = vld [vmem:[%s390 + $0x90] sm:$0xff]
        %v404 = vld [vmem:[%s390 + $0x98] sm:$0xff]
        %v405 = vld [vmem:[%s390 + $0xa8] sm:$0xff]
        %v406 = vld [vmem:[%s390 + $0xb0] sm:$0xff]
        %v407 = vld [vmem:[%s390 + $0xc0] sm:$0xff]
        %v408 = vld [vmem:[%s390 + $0xc8] sm:$0xff]
        %v409 = vld [vmem:[%s390 + $0xd8] sm:$0xff]
        %v410 = vld [vmem:[%s390 + $0xe0] sm:$0xff]
        %v411 = vld [vmem:[%s390 + $0xf0] sm:$0xff]
        %v412 = vld [vmem:[%s390 + $0xf8] sm:$0xff]
        %v413 = vld [vmem:[%s390 + $0x108] sm:$0xff]
        %v414 = vld [vmem:[%s390 + $0x110] sm:$0xff]
        %v415 = vld [vmem:[%s390 + $0x120] sm:$0xff]
        %v416 = vld [vmem:[%s390 + $0x128] sm:$0xff]
        %v417 = vld [vmem:[%s390 + $0x138] sm:$0xff]
        %v418 = vld [vmem:[%s390 + $0x140] sm:$0xff]
        %v419 = vld [vmem:[%s390 + $0x150] sm:$0xff]
        %v420 = vld [vmem:[%s390 + $0x158] sm:$0xff]
        %v421 = vld [vmem:[%s390 + $0x168] sm:$0xff]
        %v422 = vld [vmem:[%s390 + $0x170] sm:$0xff]
        %v423 = vld [vmem:[%s390 + $0x1] sm:$0xff]
        %v424 = vld [vmem:[%s390 + $0x9] sm:$0xff]
        %v425 = vld [vmem:[%s390 + $0x19] sm:$0xff]
        %v426 = vld [vmem:[%s390 + $0x21] sm:$0xff]
        %v427 = vld [vmem:[%s390 + $0x31] sm:$0xff]
        %v428 = vld [vmem:[%s390 + $0x39] sm:$0xff]
        %v429 = vld [vmem:[%s390 + $0x49] sm:$0xff]
        %v430 = vld [vmem:[%s390 + $0x51] sm:$0xff]
        %v431 = vld [vmem:[%s390 + $0x61] sm:$0xff]
        %v432 = vld [vmem:[%s390 + $0x69] sm:$0xff]
        %v433 = vld [vmem:[%s390 + $0x79] sm:$0xff]
        %v434 = vld [vmem:[%s390 + $0x81] sm:$0xff]
        %v435 = vld [vmem:[%s390 + $0x91] sm:$0xff]
        %v436 = vld [vmem:[%s390 + $0x99] sm:$0xff]
        %v437 = vld [vmem:[%s390 + $0xa9] sm:$0xff]
        %v438 = vld [vmem:[%s390 + $0xb1] sm:$0xff]
        %v439 = vld [vmem:[%s390 + $0xc1] sm:$0xff]
        %v440 = vld [vmem:[%s390 + $0xc9] sm:$0xff]
        %v441 = vld [vmem:[%s390 + $0xd9] sm:$0xff]
        %v442 = vld [vmem:[%s390 + $0xe1] sm:$0xff]
        %v443 = vld [vmem:[%s390 + $0xf1] sm:$0xff]
        %v444 = vld [vmem:[%s390 + $0xf9] sm:$0xff]
        %v445 = vld [vmem:[%s390 + $0x109] sm:$0xff]
        %v446 = vld [vmem:[%s390 + $0x111] sm:$0xff]
        %v447 = vld [vmem:[%s390 + $0x121] sm:$0xff]
        %v448 = vld [vmem:[%s390 + $0x129] sm:$0xff]
        %v449 = vld [vmem:[%s390 + $0x139] sm:$0xff]
        %v450 = vld [vmem:[%s390 + $0x141] sm:$0xff]
        %v451 = vld [vmem:[%s390 + $0x151] sm:$0xff]
        %v452 = vld [vmem:[%s390 + $0x159] sm:$0xff]
        %v453 = vld [vmem:[%s390 + $0x169] sm:$0xff]
        %v454 = vld [vmem:[%s390 + $0x171] sm:$0xff]
        %v455 = vld [vmem:[%s390 + $0x2] sm:$0xff]
        %v456 = vld [vmem:[%s390 + $0xa] sm:$0xff]
        %v457 = vld [vmem:[%s390 + $0x1a] sm:$0xff]
        %v458 = vld [vmem:[%s390 + $0x22] sm:$0xff]
        %v459 = vld [vmem:[%s390 + $0x32] sm:$0xff]
        %v460 = vld [vmem:[%s390 + $0x3a] sm:$0xff]
        %v461 = vld [vmem:[%s390 + $0x4a] sm:$0xff]
        %v462 = vld [vmem:[%s390 + $0x52] sm:$0xff]
        %v463 = vld [vmem:[%s390 + $0x62] sm:$0xff]
        %v464 = vld [vmem:[%s390 + $0x6a] sm:$0xff]
        %v465 = vld [vmem:[%s390 + $0x7a] sm:$0xff]
        %v466 = vld [vmem:[%s390 + $0x82] sm:$0xff]
        %v467 = vld [vmem:[%s390 + $0x92] sm:$0xff]
        %v468 = vld [vmem:[%s390 + $0x9a] sm:$0xff]
        %v469 = vld [vmem:[%s390 + $0xaa] sm:$0xff]
        %v470 = vld [vmem:[%s390 + $0xb2] sm:$0xff]
        %v471 = vld [vmem:[%s390 + $0xc2] sm:$0xff]
        %v472 = vld [vmem:[%s390 + $0xca] sm:$0xff]
        %v473 = vld [vmem:[%s390 + $0xda] sm:$0xff]
        %v474 = vld [vmem:[%s390 + $0xe2] sm:$0xff]
        %v475 = vld [vmem:[%s390 + $0xf2] sm:$0xff]
        %v476 = vld [vmem:[%s390 + $0xfa] sm:$0xff]
        %v477 = vld [vmem:[%s390 + $0x10a] sm:$0xff]
        %v478 = vld [vmem:[%s390 + $0x112] sm:$0xff]
        %v479 = vld [vmem:[%s390 + $0x122] sm:$0xff]
        %v480 = vld [vmem:[%s390 + $0x12a] sm:$0xff]
        %v481 = vld [vmem:[%s390 + $0x13a] sm:$0xff]
        %v482 = vld [vmem:[%s390 + $0x142] sm:$0xff]
        %v483 = vld [vmem:[%s390 + $0x152] sm:$0xff]
        %v484 = vld [vmem:[%s390 + $0x15a] sm:$0xff]
        %v485 = vld [vmem:[%s390 + $0x16a] sm:$0xff]
        %v486 = vld [vmem:[%s390 + $0x172] sm:$0xff]
        %519 = vrot.lane.b32.xlu0 %v229, 3
        %v520 = vpop.permute.xlu0 %519
        %521 = vrot.lane.b32.xlu0 %v230, 3
        %v522 = vpop.permute.xlu0 %521
        %523 = vrot.lane.b32.xlu0 %v231, 3
        %v524 = vpop.permute.xlu0 %523
        %525 = vrot.lane.b32.xlu0 %v232, 3
        %v526 = vpop.permute.xlu0 %525
        %527 = vrot.lane.b32.xlu0 %v233, 3
        %v528 = vpop.permute.xlu0 %527
        %529 = vrot.lane.b32.xlu0 %v234, 3
        %v530 = vpop.permute.xlu0 %529
        %531 = vrot.lane.b32.xlu0 %v235, 3
        %v532 = vpop.permute.xlu0 %531
        %533 = vrot.lane.b32.xlu0 %v236, 3
        %v534 = vpop.permute.xlu0 %533
        %535 = vrot.lane.b32.xlu0 %v237, 3
        %v536 = vpop.permute.xlu0 %535
        %537 = vrot.lane.b32.xlu0 %v238, 3
        %v538 = vpop.permute.xlu0 %537
        %539 = vrot.lane.b32.xlu0 %v239, 3
        %v540 = vpop.permute.xlu0 %539
        %541 = vrot.lane.b32.xlu0 %v240, 3
        %v542 = vpop.permute.xlu0 %541
        %543 = vrot.lane.b32.xlu0 %v241, 3
        %v544 = vpop.permute.xlu0 %543
        %545 = vrot.lane.b32.xlu0 %v242, 3
        %v546 = vpop.permute.xlu0 %545
        %547 = vrot.lane.b32.xlu0 %v243, 3
        %v548 = vpop.permute.xlu0 %547
        %549 = vrot.lane.b32.xlu0 %v244, 3
        %v550 = vpop.permute.xlu0 %549
        %551 = vrot.lane.b32.xlu0 %v245, 3
        %v552 = vpop.permute.xlu0 %551
        %553 = vrot.lane.b32.xlu0 %v246, 3
        %v554 = vpop.permute.xlu0 %553
        %555 = vrot.lane.b32.xlu0 %v247, 3
        %v556 = vpop.permute.xlu0 %555
        %557 = vrot.lane.b32.xlu0 %v248, 3
        %v558 = vpop.permute.xlu0 %557
        %559 = vrot.lane.b32.xlu0 %v249, 3
        %v560 = vpop.permute.xlu0 %559
        %561 = vrot.lane.b32.xlu0 %v250, 3
        %v562 = vpop.permute.xlu0 %561
        %563 = vrot.lane.b32.xlu0 %v251, 3
        %v564 = vpop.permute.xlu0 %563
        %565 = vrot.lane.b32.xlu0 %v252, 3
        %v566 = vpop.permute.xlu0 %565
        %567 = vrot.lane.b32.xlu0 %v253, 3
        %v568 = vpop.permute.xlu0 %567
        %569 = vrot.lane.b32.xlu0 %v254, 3
        %v570 = vpop.permute.xlu0 %569
        %571 = vrot.lane.b32.xlu0 %v255, 3
        %v572 = vpop.permute.xlu0 %571
        %573 = vrot.lane.b32.xlu0 %v256, 3
        %v574 = vpop.permute.xlu0 %573
        %575 = vrot.lane.b32.xlu0 %v257, 3
        %v576 = vpop.permute.xlu0 %575
        %577 = vrot.lane.b32.xlu0 %v258, 3
        %v578 = vpop.permute.xlu0 %577
        %579 = vrot.lane.b32.xlu0 %v259, 3
        %v580 = vpop.permute.xlu0 %579
        %581 = vrot.lane.b32.xlu0 %v260, 3
        %v582 = vpop.permute.xlu0 %581
        %647 = vrot.lane.b32.xlu0 %v261, 6
        %v648 = vpop.permute.xlu0 %647
        %649 = vrot.lane.b32.xlu0 %v262, 6
        %v650 = vpop.permute.xlu0 %649
        %651 = vrot.lane.b32.xlu0 %v263, 6
        %v652 = vpop.permute.xlu0 %651
        %653 = vrot.lane.b32.xlu0 %v264, 6
        %v654 = vpop.permute.xlu0 %653
        %655 = vrot.lane.b32.xlu0 %v265, 6
        %v656 = vpop.permute.xlu0 %655
        %657 = vrot.lane.b32.xlu0 %v266, 6
        %v658 = vpop.permute.xlu0 %657
        %659 = vrot.lane.b32.xlu0 %v267, 6
        %v660 = vpop.permute.xlu0 %659
        %661 = vrot.lane.b32.xlu0 %v268, 6
        %v662 = vpop.permute.xlu0 %661
        %663 = vrot.lane.b32.xlu0 %v269, 6
        %v664 = vpop.permute.xlu0 %663
        %665 = vrot.lane.b32.xlu0 %v270, 6
        %v666 = vpop.permute.xlu0 %665
        %667 = vrot.lane.b32.xlu0 %v271, 6
        %v668 = vpop.permute.xlu0 %667
        %669 = vrot.lane.b32.xlu0 %v272, 6
        %v670 = vpop.permute.xlu0 %669
        %671 = vrot.lane.b32.xlu0 %v273, 6
        %v672 = vpop.permute.xlu0 %671
        %673 = vrot.lane.b32.xlu0 %v274, 6
        %v674 = vpop.permute.xlu0 %673
        %675 = vrot.lane.b32.xlu0 %v275, 6
        %v676 = vpop.permute.xlu0 %675
        %677 = vrot.lane.b32.xlu0 %v276, 6
        %v678 = vpop.permute.xlu0 %677
        %679 = vrot.lane.b32.xlu0 %v277, 6
        %v680 = vpop.permute.xlu0 %679
        %681 = vrot.lane.b32.xlu0 %v278, 6
        %v682 = vpop.permute.xlu0 %681
        %683 = vrot.lane.b32.xlu0 %v279, 6
        %v684 = vpop.permute.xlu0 %683
        %685 = vrot.lane.b32.xlu0 %v280, 6
        %v686 = vpop.permute.xlu0 %685
        %687 = vrot.lane.b32.xlu0 %v281, 6
        %v688 = vpop.permute.xlu0 %687
        %689 = vrot.lane.b32.xlu0 %v282, 6
        %v690 = vpop.permute.xlu0 %689
        %691 = vrot.lane.b32.xlu0 %v283, 6
        %v692 = vpop.permute.xlu0 %691
        %693 = vrot.lane.b32.xlu0 %v284, 6
        %v694 = vpop.permute.xlu0 %693
        %695 = vrot.lane.b32.xlu0 %v285, 6
        %v696 = vpop.permute.xlu0 %695
        %697 = vrot.lane.b32.xlu0 %v286, 6
        %v698 = vpop.permute.xlu0 %697
        %699 = vrot.lane.b32.xlu0 %v287, 6
        %v700 = vpop.permute.xlu0 %699
        %701 = vrot.lane.b32.xlu0 %v288, 6
        %v702 = vpop.permute.xlu0 %701
        %703 = vrot.lane.b32.xlu0 %v289, 6
        %v704 = vpop.permute.xlu0 %703
        %705 = vrot.lane.b32.xlu0 %v290, 6
        %v706 = vpop.permute.xlu0 %705
        %707 = vrot.lane.b32.xlu0 %v291, 6
        %v708 = vpop.permute.xlu0 %707
        %709 = vrot.lane.b32.xlu0 %v292, 6
        %v710 = vpop.permute.xlu0 %709
        %775 = vrot.lane.b32.xlu0 %v294, 9
        %v776 = vpop.permute.xlu0 %775
        %777 = vrot.lane.b32.xlu0 %v295, 9
        %v778 = vpop.permute.xlu0 %777
        %779 = vrot.lane.b32.xlu0 %v296, 9
        %v780 = vpop.permute.xlu0 %779
        %781 = vrot.lane.b32.xlu0 %v297, 9
        %v782 = vpop.permute.xlu0 %781
        %783 = vrot.lane.b32.xlu0 %v298, 9
        %v784 = vpop.permute.xlu0 %783
        %785 = vrot.lane.b32.xlu0 %v299, 9
        %v786 = vpop.permute.xlu0 %785
        %787 = vrot.lane.b32.xlu0 %v300, 9
        %v788 = vpop.permute.xlu0 %787
        %789 = vrot.lane.b32.xlu0 %v301, 9
        %v790 = vpop.permute.xlu0 %789
        %791 = vrot.lane.b32.xlu0 %v302, 9
        %v792 = vpop.permute.xlu0 %791
        %793 = vrot.lane.b32.xlu0 %v303, 9
        %v794 = vpop.permute.xlu0 %793
        %795 = vrot.lane.b32.xlu0 %v304, 9
        %v796 = vpop.permute.xlu0 %795
        %797 = vrot.lane.b32.xlu0 %v305, 9
        %v798 = vpop.permute.xlu0 %797
        %799 = vrot.lane.b32.xlu0 %v306, 9
        %v800 = vpop.permute.xlu0 %799
        %801 = vrot.lane.b32.xlu0 %v307, 9
        %v802 = vpop.permute.xlu0 %801
        %803 = vrot.lane.b32.xlu0 %v308, 9
        %v804 = vpop.permute.xlu0 %803
        %805 = vrot.lane.b32.xlu0 %v309, 9
        %v806 = vpop.permute.xlu0 %805
        %807 = vrot.lane.b32.xlu0 %v310, 9
        %v808 = vpop.permute.xlu0 %807
        %809 = vrot.lane.b32.xlu0 %v311, 9
        %v810 = vpop.permute.xlu0 %809
        %811 = vrot.lane.b32.xlu0 %v312, 9
        %v812 = vpop.permute.xlu0 %811
        %813 = vrot.lane.b32.xlu0 %v313, 9
        %v814 = vpop.permute.xlu0 %813
        %815 = vrot.lane.b32.xlu0 %v314, 9
        %v816 = vpop.permute.xlu0 %815
        %817 = vrot.lane.b32.xlu0 %v315, 9
        %v818 = vpop.permute.xlu0 %817
        %819 = vrot.lane.b32.xlu0 %v316, 9
        %v820 = vpop.permute.xlu0 %819
        %821 = vrot.lane.b32.xlu0 %v317, 9
        %v822 = vpop.permute.xlu0 %821
        %823 = vrot.lane.b32.xlu0 %v318, 9
        %v824 = vpop.permute.xlu0 %823
        %825 = vrot.lane.b32.xlu0 %v319, 9
        %v826 = vpop.permute.xlu0 %825
        %827 = vrot.lane.b32.xlu0 %v320, 9
        %v828 = vpop.permute.xlu0 %827
        %829 = vrot.lane.b32.xlu0 %v321, 9
        %v830 = vpop.permute.xlu0 %829
        %831 = vrot.lane.b32.xlu0 %v322, 9
        %v832 = vpop.permute.xlu0 %831
        %833 = vrot.lane.b32.xlu0 %v323, 9
        %v834 = vpop.permute.xlu0 %833
        %835 = vrot.lane.b32.xlu0 %v324, 9
        %v836 = vpop.permute.xlu0 %835
        %837 = vrot.lane.b32.xlu0 %v325, 9
        %v838 = vpop.permute.xlu0 %837
        %903 = vrot.lane.b32.xlu0 %v326, 12
        %v904 = vpop.permute.xlu0 %903
        %905 = vrot.lane.b32.xlu0 %v327, 12
        %v906 = vpop.permute.xlu0 %905
        %907 = vrot.lane.b32.xlu0 %v328, 12
        %v908 = vpop.permute.xlu0 %907
        %909 = vrot.lane.b32.xlu0 %v329, 12
        %v910 = vpop.permute.xlu0 %909
        %911 = vrot.lane.b32.xlu0 %v330, 12
        %v912 = vpop.permute.xlu0 %911
        %913 = vrot.lane.b32.xlu0 %v331, 12
        %v914 = vpop.permute.xlu0 %913
        %915 = vrot.lane.b32.xlu0 %v332, 12
        %v916 = vpop.permute.xlu0 %915
        %917 = vrot.lane.b32.xlu0 %v333, 12
        %v918 = vpop.permute.xlu0 %917
        %919 = vrot.lane.b32.xlu0 %v334, 12
        %v920 = vpop.permute.xlu0 %919
        %921 = vrot.lane.b32.xlu0 %v335, 12
        %v922 = vpop.permute.xlu0 %921
        %923 = vrot.lane.b32.xlu0 %v336, 12
        %v924 = vpop.permute.xlu0 %923
        %925 = vrot.lane.b32.xlu0 %v337, 12
        %v926 = vpop.permute.xlu0 %925
        %927 = vrot.lane.b32.xlu0 %v338, 12
        %v928 = vpop.permute.xlu0 %927
        %929 = vrot.lane.b32.xlu0 %v339, 12
        %v930 = vpop.permute.xlu0 %929
        %931 = vrot.lane.b32.xlu0 %v340, 12
        %v932 = vpop.permute.xlu0 %931
        %933 = vrot.lane.b32.xlu0 %v341, 12
        %v934 = vpop.permute.xlu0 %933
        %935 = vrot.lane.b32.xlu0 %v342, 12
        %v936 = vpop.permute.xlu0 %935
        %937 = vrot.lane.b32.xlu0 %v343, 12
        %v938 = vpop.permute.xlu0 %937
        %939 = vrot.lane.b32.xlu0 %v344, 12
        %v940 = vpop.permute.xlu0 %939
        %941 = vrot.lane.b32.xlu0 %v345, 12
        %v942 = vpop.permute.xlu0 %941
        %943 = vrot.lane.b32.xlu0 %v346, 12
        %v944 = vpop.permute.xlu0 %943
        %945 = vrot.lane.b32.xlu0 %v347, 12
        %v946 = vpop.permute.xlu0 %945
        %947 = vrot.lane.b32.xlu0 %v348, 12
        %v948 = vpop.permute.xlu0 %947
        %949 = vrot.lane.b32.xlu0 %v349, 12
        %v950 = vpop.permute.xlu0 %949
        %951 = vrot.lane.b32.xlu0 %v350, 12
        %v952 = vpop.permute.xlu0 %951
        %953 = vrot.lane.b32.xlu0 %v351, 12
        %v954 = vpop.permute.xlu0 %953
        %955 = vrot.lane.b32.xlu0 %v352, 12
        %v956 = vpop.permute.xlu0 %955
        %957 = vrot.lane.b32.xlu0 %v353, 12
        %v958 = vpop.permute.xlu0 %957
        %959 = vrot.lane.b32.xlu0 %v354, 12
        %v960 = vpop.permute.xlu0 %959
        %961 = vrot.lane.b32.xlu0 %v355, 12
        %v962 = vpop.permute.xlu0 %961
        %963 = vrot.lane.b32.xlu0 %v356, 12
        %v964 = vpop.permute.xlu0 %963
        %965 = vrot.lane.b32.xlu0 %v357, 12
        %v966 = vpop.permute.xlu0 %965
        %1031 = vrot.lane.b32.xlu0 %v358, 15
        %v1032 = vpop.permute.xlu0 %1031
        %1033 = vrot.lane.b32.xlu0 %v359, 15
        %v1034 = vpop.permute.xlu0 %1033
        %1035 = vrot.lane.b32.xlu0 %v360, 15
        %v1036 = vpop.permute.xlu0 %1035
        %1037 = vrot.lane.b32.xlu0 %v361, 15
        %v1038 = vpop.permute.xlu0 %1037
        %1039 = vrot.lane.b32.xlu0 %v362, 15
        %v1040 = vpop.permute.xlu0 %1039
        %1041 = vrot.lane.b32.xlu0 %v363, 15
        %v1042 = vpop.permute.xlu0 %1041
        %1043 = vrot.lane.b32.xlu0 %v364, 15
        %v1044 = vpop.permute.xlu0 %1043
        %1045 = vrot.lane.b32.xlu0 %v365, 15
        %v1046 = vpop.permute.xlu0 %1045
        %1047 = vrot.lane.b32.xlu0 %v366, 15
        %v1048 = vpop.permute.xlu0 %1047
        %1049 = vrot.lane.b32.xlu0 %v367, 15
        %v1050 = vpop.permute.xlu0 %1049
        %1051 = vrot.lane.b32.xlu0 %v368, 15
        %v1052 = vpop.permute.xlu0 %1051
        %1053 = vrot.lane.b32.xlu0 %v369, 15
        %v1054 = vpop.permute.xlu0 %1053
        %1055 = vrot.lane.b32.xlu0 %v370, 15
        %v1056 = vpop.permute.xlu0 %1055
        %1057 = vrot.lane.b32.xlu0 %v371, 15
        %v1058 = vpop.permute.xlu0 %1057
        %1059 = vrot.lane.b32.xlu0 %v372, 15
        %v1060 = vpop.permute.xlu0 %1059
        %1061 = vrot.lane.b32.xlu0 %v373, 15
        %v1062 = vpop.permute.xlu0 %1061
        %1063 = vrot.lane.b32.xlu0 %v374, 15
        %v1064 = vpop.permute.xlu0 %1063
        %1065 = vrot.lane.b32.xlu0 %v375, 15
        %v1066 = vpop.permute.xlu0 %1065
        %1067 = vrot.lane.b32.xlu0 %v376, 15
        %v1068 = vpop.permute.xlu0 %1067
        %1069 = vrot.lane.b32.xlu0 %v377, 15
        %v1070 = vpop.permute.xlu0 %1069
        %1071 = vrot.lane.b32.xlu0 %v378, 15
        %v1072 = vpop.permute.xlu0 %1071
        %1073 = vrot.lane.b32.xlu0 %v379, 15
        %v1074 = vpop.permute.xlu0 %1073
        %1075 = vrot.lane.b32.xlu0 %v380, 15
        %v1076 = vpop.permute.xlu0 %1075
        %1077 = vrot.lane.b32.xlu0 %v381, 15
        %v1078 = vpop.permute.xlu0 %1077
        %1079 = vrot.lane.b32.xlu0 %v382, 15
        %v1080 = vpop.permute.xlu0 %1079
        %1081 = vrot.lane.b32.xlu0 %v383, 15
        %v1082 = vpop.permute.xlu0 %1081
        %1083 = vrot.lane.b32.xlu0 %v384, 15
        %v1084 = vpop.permute.xlu0 %1083
        %1085 = vrot.lane.b32.xlu0 %v385, 15
        %v1086 = vpop.permute.xlu0 %1085
        %1087 = vrot.lane.b32.xlu0 %v386, 15
        %v1088 = vpop.permute.xlu0 %1087
        %1089 = vrot.lane.b32.xlu0 %v387, 15
        %v1090 = vpop.permute.xlu0 %1089
        %1091 = vrot.lane.b32.xlu0 %v388, 15
        %v1092 = vpop.permute.xlu0 %1091
        %1093 = vrot.lane.b32.xlu0 %v389, 15
        %v1094 = vpop.permute.xlu0 %1093
        %1159 = vrot.lane.b32.xlu0 %v391, 18
        %v1160 = vpop.permute.xlu0 %1159
        %1161 = vrot.lane.b32.xlu0 %v392, 18
        %v1162 = vpop.permute.xlu0 %1161
        %1163 = vrot.lane.b32.xlu0 %v393, 18
        %v1164 = vpop.permute.xlu0 %1163
        %1165 = vrot.lane.b32.xlu0 %v394, 18
        %v1166 = vpop.permute.xlu0 %1165
        %1167 = vrot.lane.b32.xlu0 %v395, 18
        %v1168 = vpop.permute.xlu0 %1167
        %1169 = vrot.lane.b32.xlu0 %v396, 18
        %v1170 = vpop.permute.xlu0 %1169
        %1171 = vrot.lane.b32.xlu0 %v397, 18
        %v1172 = vpop.permute.xlu0 %1171
        %1173 = vrot.lane.b32.xlu0 %v398, 18
        %v1174 = vpop.permute.xlu0 %1173
        %1175 = vrot.lane.b32.xlu0 %v399, 18
        %v1176 = vpop.permute.xlu0 %1175
        %1177 = vrot.lane.b32.xlu0 %v400, 18
        %v1178 = vpop.permute.xlu0 %1177
        %1179 = vrot.lane.b32.xlu0 %v401, 18
        %v1180 = vpop.permute.xlu0 %1179
        %1181 = vrot.lane.b32.xlu0 %v402, 18
        %v1182 = vpop.permute.xlu0 %1181
        %1183 = vrot.lane.b32.xlu0 %v403, 18
        %v1184 = vpop.permute.xlu0 %1183
        %1185 = vrot.lane.b32.xlu0 %v404, 18
        %v1186 = vpop.permute.xlu0 %1185
        %1187 = vrot.lane.b32.xlu0 %v405, 18
        %v1188 = vpop.permute.xlu0 %1187
        %1189 = vrot.lane.b32.xlu0 %v406, 18
        %v1190 = vpop.permute.xlu0 %1189
        %1191 = vrot.lane.b32.xlu0 %v407, 18
        %v1192 = vpop.permute.xlu0 %1191
        %1193 = vrot.lane.b32.xlu0 %v408, 18
        %v1194 = vpop.permute.xlu0 %1193
        %1195 = vrot.lane.b32.xlu0 %v409, 18
        %v1196 = vpop.permute.xlu0 %1195
        %1197 = vrot.lane.b32.xlu0 %v410, 18
        %v1198 = vpop.permute.xlu0 %1197
        %1199 = vrot.lane.b32.xlu0 %v411, 18
        %v1200 = vpop.permute.xlu0 %1199
        %1201 = vrot.lane.b32.xlu0 %v412, 18
        %v1202 = vpop.permute.xlu0 %1201
        %1203 = vrot.lane.b32.xlu0 %v413, 18
        %v1204 = vpop.permute.xlu0 %1203
        %1205 = vrot.lane.b32.xlu0 %v414, 18
        %v1206 = vpop.permute.xlu0 %1205
        %1207 = vrot.lane.b32.xlu0 %v415, 18
        %v1208 = vpop.permute.xlu0 %1207
        %1209 = vrot.lane.b32.xlu0 %v416, 18
        %v1210 = vpop.permute.xlu0 %1209
        %1211 = vrot.lane.b32.xlu0 %v417, 18
        %v1212 = vpop.permute.xlu0 %1211
        %1213 = vrot.lane.b32.xlu0 %v418, 18
        %v1214 = vpop.permute.xlu0 %1213
        %1215 = vrot.lane.b32.xlu0 %v419, 18
        %v1216 = vpop.permute.xlu0 %1215
        %1217 = vrot.lane.b32.xlu0 %v420, 18
        %v1218 = vpop.permute.xlu0 %1217
        %1219 = vrot.lane.b32.xlu0 %v421, 18
        %v1220 = vpop.permute.xlu0 %1219
        %1221 = vrot.lane.b32.xlu0 %v422, 18
        %v1222 = vpop.permute.xlu0 %1221
        %1287 = vrot.lane.b32.xlu0 %v423, 21
        %v1288 = vpop.permute.xlu0 %1287
        %1289 = vrot.lane.b32.xlu0 %v424, 21
        %v1290 = vpop.permute.xlu0 %1289
        %1291 = vrot.lane.b32.xlu0 %v425, 21
        %v1292 = vpop.permute.xlu0 %1291
        %1293 = vrot.lane.b32.xlu0 %v426, 21
        %v1294 = vpop.permute.xlu0 %1293
        %1295 = vrot.lane.b32.xlu0 %v427, 21
        %v1296 = vpop.permute.xlu0 %1295
        %1297 = vrot.lane.b32.xlu0 %v428, 21
        %v1298 = vpop.permute.xlu0 %1297
        %1299 = vrot.lane.b32.xlu0 %v429, 21
        %v1300 = vpop.permute.xlu0 %1299
        %1301 = vrot.lane.b32.xlu0 %v430, 21
        %v1302 = vpop.permute.xlu0 %1301
        %1303 = vrot.lane.b32.xlu0 %v431, 21
        %v1304 = vpop.permute.xlu0 %1303
        %1305 = vrot.lane.b32.xlu0 %v432, 21
        %v1306 = vpop.permute.xlu0 %1305
        %1307 = vrot.lane.b32.xlu0 %v433, 21
        %v1308 = vpop.permute.xlu0 %1307
        %1309 = vrot.lane.b32.xlu0 %v434, 21
        %v1310 = vpop.permute.xlu0 %1309
        %1311 = vrot.lane.b32.xlu0 %v435, 21
        %v1312 = vpop.permute.xlu0 %1311
        %1313 = vrot.lane.b32.xlu0 %v436, 21
        %v1314 = vpop.permute.xlu0 %1313
        %1315 = vrot.lane.b32.xlu0 %v437, 21
        %v1316 = vpop.permute.xlu0 %1315
        %1317 = vrot.lane.b32.xlu0 %v438, 21
        %v1318 = vpop.permute.xlu0 %1317
        %1319 = vrot.lane.b32.xlu0 %v439, 21
        %v1320 = vpop.permute.xlu0 %1319
        %1321 = vrot.lane.b32.xlu0 %v440, 21
        %v1322 = vpop.permute.xlu0 %1321
        %1323 = vrot.lane.b32.xlu0 %v441, 21
        %v1324 = vpop.permute.xlu0 %1323
        %1325 = vrot.lane.b32.xlu0 %v442, 21
        %v1326 = vpop.permute.xlu0 %1325
        %1327 = vrot.lane.b32.xlu0 %v443, 21
        %v1328 = vpop.permute.xlu0 %1327
        %1329 = vrot.lane.b32.xlu0 %v444, 21
        %v1330 = vpop.permute.xlu0 %1329
        %1331 = vrot.lane.b32.xlu0 %v445, 21
        %v1332 = vpop.permute.xlu0 %1331
        %1333 = vrot.lane.b32.xlu0 %v446, 21
        %v1334 = vpop.permute.xlu0 %1333
        %1335 = vrot.lane.b32.xlu0 %v447, 21
        %v1336 = vpop.permute.xlu0 %1335
        %1337 = vrot.lane.b32.xlu0 %v448, 21
        %v1338 = vpop.permute.xlu0 %1337
        %1339 = vrot.lane.b32.xlu0 %v449, 21
        %v1340 = vpop.permute.xlu0 %1339
        %1341 = vrot.lane.b32.xlu0 %v450, 21
        %v1342 = vpop.permute.xlu0 %1341
        %1343 = vrot.lane.b32.xlu0 %v451, 21
        %v1344 = vpop.permute.xlu0 %1343
        %1345 = vrot.lane.b32.xlu0 %v452, 21
        %v1346 = vpop.permute.xlu0 %1345
        %1347 = vrot.lane.b32.xlu0 %v453, 21
        %v1348 = vpop.permute.xlu0 %1347
        %1349 = vrot.lane.b32.xlu0 %v454, 21
        %v1350 = vpop.permute.xlu0 %1349
        %1415 = vrot.lane.b32.xlu0 %v455, 24
        %v1416 = vpop.permute.xlu0 %1415
        %1417 = vrot.lane.b32.xlu0 %v456, 24
        %v1418 = vpop.permute.xlu0 %1417
        %1419 = vrot.lane.b32.xlu0 %v457, 24
        %v1420 = vpop.permute.xlu0 %1419
        %1421 = vrot.lane.b32.xlu0 %v458, 24
        %v1422 = vpop.permute.xlu0 %1421
        %1423 = vrot.lane.b32.xlu0 %v459, 24
        %v1424 = vpop.permute.xlu0 %1423
        %1425 = vrot.lane.b32.xlu0 %v460, 24
        %v1426 = vpop.permute.xlu0 %1425
        %1427 = vrot.lane.b32.xlu0 %v461, 24
        %v1428 = vpop.permute.xlu0 %1427
        %1429 = vrot.lane.b32.xlu0 %v462, 24
        %v1430 = vpop.permute.xlu0 %1429
        %1431 = vrot.lane.b32.xlu0 %v463, 24
        %v1432 = vpop.permute.xlu0 %1431
        %1433 = vrot.lane.b32.xlu0 %v464, 24
        %v1434 = vpop.permute.xlu0 %1433
        %1435 = vrot.lane.b32.xlu0 %v465, 24
        %v1436 = vpop.permute.xlu0 %1435
        %1437 = vrot.lane.b32.xlu0 %v466, 24
        %v1438 = vpop.permute.xlu0 %1437
        %1439 = vrot.lane.b32.xlu0 %v467, 24
        %v1440 = vpop.permute.xlu0 %1439
        %1441 = vrot.lane.b32.xlu0 %v468, 24
        %v1442 = vpop.permute.xlu0 %1441
        %1443 = vrot.lane.b32.xlu0 %v469, 24
        %v1444 = vpop.permute.xlu0 %1443
        %1445 = vrot.lane.b32.xlu0 %v470, 24
        %v1446 = vpop.permute.xlu0 %1445
        %1447 = vrot.lane.b32.xlu0 %v471, 24
        %v1448 = vpop.permute.xlu0 %1447
        %1449 = vrot.lane.b32.xlu0 %v472, 24
        %v1450 = vpop.permute.xlu0 %1449
        %1451 = vrot.lane.b32.xlu0 %v473, 24
        %v1452 = vpop.permute.xlu0 %1451
        %1453 = vrot.lane.b32.xlu0 %v474, 24
        %v1454 = vpop.permute.xlu0 %1453
        %1455 = vrot.lane.b32.xlu0 %v475, 24
        %v1456 = vpop.permute.xlu0 %1455
        %1457 = vrot.lane.b32.xlu0 %v476, 24
        %v1458 = vpop.permute.xlu0 %1457
        %1459 = vrot.lane.b32.xlu0 %v477, 24
        %v1460 = vpop.permute.xlu0 %1459
        %1461 = vrot.lane.b32.xlu0 %v478, 24
        %v1462 = vpop.permute.xlu0 %1461
        %1463 = vrot.lane.b32.xlu0 %v479, 24
        %v1464 = vpop.permute.xlu0 %1463
        %1465 = vrot.lane.b32.xlu0 %v480, 24
        %v1466 = vpop.permute.xlu0 %1465
        %1467 = vrot.lane.b32.xlu0 %v481, 24
        %v1468 = vpop.permute.xlu0 %1467
        %1469 = vrot.lane.b32.xlu0 %v482, 24
        %v1470 = vpop.permute.xlu0 %1469
        %1471 = vrot.lane.b32.xlu0 %v483, 24
        %v1472 = vpop.permute.xlu0 %1471
        %1473 = vrot.lane.b32.xlu0 %v484, 24
        %v1474 = vpop.permute.xlu0 %1473
        %1475 = vrot.lane.b32.xlu0 %v485, 24
        %v1476 = vpop.permute.xlu0 %1475
        %1477 = vrot.lane.b32.xlu0 %v486, 24
        %v1478 = vpop.permute.xlu0 %1477
        %vm1511 = vcmask 23552
        %v1512 = vsel %vm1511, %v197, %v520
        %v1513 = vsel %vm1511, %v198, %v522
        %v1514 = vsel %vm1511, %v199, %v524
        %v1515 = vsel %vm1511, %v200, %v526
        %v1516 = vsel %vm1511, %v201, %v528
        %v1517 = vsel %vm1511, %v202, %v530
        %v1518 = vsel %vm1511, %v203, %v532
        %v1519 = vsel %vm1511, %v204, %v534
        %v1520 = vsel %vm1511, %v205, %v536
        %v1521 = vsel %vm1511, %v206, %v538
        %v1522 = vsel %vm1511, %v207, %v540
        %v1523 = vsel %vm1511, %v208, %v542
        %v1524 = vsel %vm1511, %v209, %v544
        %v1525 = vsel %vm1511, %v210, %v546
        %v1526 = vsel %vm1511, %v211, %v548
        %v1527 = vsel %vm1511, %v212, %v550
        %v1528 = vsel %vm1511, %v213, %v552
        %v1529 = vsel %vm1511, %v214, %v554
        %v1530 = vsel %vm1511, %v215, %v556
        %v1531 = vsel %vm1511, %v216, %v558
        %v1532 = vsel %vm1511, %v217, %v560
        %v1533 = vsel %vm1511, %v218, %v562
        %v1534 = vsel %vm1511, %v219, %v564
        %v1535 = vsel %vm1511, %v220, %v566
        %v1536 = vsel %vm1511, %v221, %v568
        %v1537 = vsel %vm1511, %v222, %v570
        %v1538 = vsel %vm1511, %v223, %v572
        %v1539 = vsel %vm1511, %v224, %v574
        %v1540 = vsel %vm1511, %v225, %v576
        %v1541 = vsel %vm1511, %v226, %v578
        %v1542 = vsel %vm1511, %v227, %v580
        %v1543 = vsel %vm1511, %v228, %v582
        %vm1544 = vcmask 48128
        %v1545 = vsel %vm1544, %v1512, %v648
        %v1546 = vsel %vm1544, %v1513, %v650
        %v1547 = vsel %vm1544, %v1514, %v652
        %v1548 = vsel %vm1544, %v1515, %v654
        %v1549 = vsel %vm1544, %v1516, %v656
        %v1550 = vsel %vm1544, %v1517, %v658
        %v1551 = vsel %vm1544, %v1518, %v660
        %v1552 = vsel %vm1544, %v1519, %v662
        %v1553 = vsel %vm1544, %v1520, %v664
        %v1554 = vsel %vm1544, %v1521, %v666
        %v1555 = vsel %vm1544, %v1522, %v668
        %v1556 = vsel %vm1544, %v1523, %v670
        %v1557 = vsel %vm1544, %v1524, %v672
        %v1558 = vsel %vm1544, %v1525, %v674
        %v1559 = vsel %vm1544, %v1526, %v676
        %v1560 = vsel %vm1544, %v1527, %v678
        %v1561 = vsel %vm1544, %v1528, %v680
        %v1562 = vsel %vm1544, %v1529, %v682
        %v1563 = vsel %vm1544, %v1530, %v684
        %v1564 = vsel %vm1544, %v1531, %v686
        %v1565 = vsel %vm1544, %v1532, %v688
        %v1566 = vsel %vm1544, %v1533, %v690
        %v1567 = vsel %vm1544, %v1534, %v692
        %v1568 = vsel %vm1544, %v1535, %v694
        %v1569 = vsel %vm1544, %v1536, %v696
        %v1570 = vsel %vm1544, %v1537, %v698
        %v1571 = vsel %vm1544, %v1538, %v700
        %v1572 = vsel %vm1544, %v1539, %v702
        %v1573 = vsel %vm1544, %v1540, %v704
        %v1574 = vsel %vm1544, %v1541, %v706
        %v1575 = vsel %vm1544, %v1542, %v708
        %v1576 = vsel %vm1544, %v1543, %v710
        %vm1577 = vcmask 72704
        %v1578 = vsel %vm1577, %v1545, %v776
        %v1579 = vsel %vm1577, %v1546, %v778
        %v1580 = vsel %vm1577, %v1547, %v780
        %v1581 = vsel %vm1577, %v1548, %v782
        %v1582 = vsel %vm1577, %v1549, %v784
        %v1583 = vsel %vm1577, %v1550, %v786
        %v1584 = vsel %vm1577, %v1551, %v788
        %v1585 = vsel %vm1577, %v1552, %v790
        %v1586 = vsel %vm1577, %v1553, %v792
        %v1587 = vsel %vm1577, %v1554, %v794
        %v1588 = vsel %vm1577, %v1555, %v796
        %v1589 = vsel %vm1577, %v1556, %v798
        %v1590 = vsel %vm1577, %v1557, %v800
        %v1591 = vsel %vm1577, %v1558, %v802
        %v1592 = vsel %vm1577, %v1559, %v804
        %v1593 = vsel %vm1577, %v1560, %v806
        %v1594 = vsel %vm1577, %v1561, %v808
        %v1595 = vsel %vm1577, %v1562, %v810
        %v1596 = vsel %vm1577, %v1563, %v812
        %v1597 = vsel %vm1577, %v1564, %v814
        %v1598 = vsel %vm1577, %v1565, %v816
        %v1599 = vsel %vm1577, %v1566, %v818
        %v1600 = vsel %vm1577, %v1567, %v820
        %v1601 = vsel %vm1577, %v1568, %v822
        %v1602 = vsel %vm1577, %v1569, %v824
        %v1603 = vsel %vm1577, %v1570, %v826
        %v1604 = vsel %vm1577, %v1571, %v828
        %v1605 = vsel %vm1577, %v1572, %v830
        %v1606 = vsel %vm1577, %v1573, %v832
        %v1607 = vsel %vm1577, %v1574, %v834
        %v1608 = vsel %vm1577, %v1575, %v836
        %v1609 = vsel %vm1577, %v1576, %v838
        %vm1610 = vcmask 97280
        %v1611 = vsel %vm1610, %v1578, %v904
        %v1612 = vsel %vm1610, %v1579, %v906
        %v1613 = vsel %vm1610, %v1580, %v908
        %v1614 = vsel %vm1610, %v1581, %v910
        %v1615 = vsel %vm1610, %v1582, %v912
        %v1616 = vsel %vm1610, %v1583, %v914
        %v1617 = vsel %vm1610, %v1584, %v916
        %v1618 = vsel %vm1610, %v1585, %v918
        %v1619 = vsel %vm1610, %v1586, %v920
        %v1620 = vsel %vm1610, %v1587, %v922
        %v1621 = vsel %vm1610, %v1588, %v924
        %v1622 = vsel %vm1610, %v1589, %v926
        %v1623 = vsel %vm1610, %v1590, %v928
        %v1624 = vsel %vm1610, %v1591, %v930
        %v1625 = vsel %vm1610, %v1592, %v932
        %v1626 = vsel %vm1610, %v1593, %v934
        %v1627 = vsel %vm1610, %v1594, %v936
        %v1628 = vsel %vm1610, %v1595, %v938
        %v1629 = vsel %vm1610, %v1596, %v940
        %v1630 = vsel %vm1610, %v1597, %v942
        %v1631 = vsel %vm1610, %v1598, %v944
        %v1632 = vsel %vm1610, %v1599, %v946
        %v1633 = vsel %vm1610, %v1600, %v948
        %v1634 = vsel %vm1610, %v1601, %v950
        %v1635 = vsel %vm1610, %v1602, %v952
        %v1636 = vsel %vm1610, %v1603, %v954
        %v1637 = vsel %vm1610, %v1604, %v956
        %v1638 = vsel %vm1610, %v1605, %v958
        %v1639 = vsel %vm1610, %v1606, %v960
        %v1640 = vsel %vm1610, %v1607, %v962
        %v1641 = vsel %vm1610, %v1608, %v964
        %v1642 = vsel %vm1610, %v1609, %v966
        %vm1643 = vcmask 121856
        %v1644 = vsel %vm1643, %v1611, %v1032
        %v1645 = vsel %vm1643, %v1612, %v1034
        %v1646 = vsel %vm1643, %v1613, %v1036
        %v1647 = vsel %vm1643, %v1614, %v1038
        %v1648 = vsel %vm1643, %v1615, %v1040
        %v1649 = vsel %vm1643, %v1616, %v1042
        %v1650 = vsel %vm1643, %v1617, %v1044
        %v1651 = vsel %vm1643, %v1618, %v1046
        %v1652 = vsel %vm1643, %v1619, %v1048
        %v1653 = vsel %vm1643, %v1620, %v1050
        %v1654 = vsel %vm1643, %v1621, %v1052
        %v1655 = vsel %vm1643, %v1622, %v1054
        %v1656 = vsel %vm1643, %v1623, %v1056
        %v1657 = vsel %vm1643, %v1624, %v1058
        %v1658 = vsel %vm1643, %v1625, %v1060
        %v1659 = vsel %vm1643, %v1626, %v1062
        %v1660 = vsel %vm1643, %v1627, %v1064
        %v1661 = vsel %vm1643, %v1628, %v1066
        %v1662 = vsel %vm1643, %v1629, %v1068
        %v1663 = vsel %vm1643, %v1630, %v1070
        %v1664 = vsel %vm1643, %v1631, %v1072
        %v1665 = vsel %vm1643, %v1632, %v1074
        %v1666 = vsel %vm1643, %v1633, %v1076
        %v1667 = vsel %vm1643, %v1634, %v1078
        %v1668 = vsel %vm1643, %v1635, %v1080
        %v1669 = vsel %vm1643, %v1636, %v1082
        %v1670 = vsel %vm1643, %v1637, %v1084
        %v1671 = vsel %vm1643, %v1638, %v1086
        %v1672 = vsel %vm1643, %v1639, %v1088
        %v1673 = vsel %vm1643, %v1640, %v1090
        %v1674 = vsel %vm1643, %v1641, %v1092
        %v1675 = vsel %vm1643, %v1642, %v1094
        %vm1676 = vcmask 146432
        %v1677 = vsel %vm1676, %v1644, %v1160
        %v1678 = vsel %vm1676, %v1645, %v1162
        %v1679 = vsel %vm1676, %v1646, %v1164
        %v1680 = vsel %vm1676, %v1647, %v1166
        %v1681 = vsel %vm1676, %v1648, %v1168
        %v1682 = vsel %vm1676, %v1649, %v1170
        %v1683 = vsel %vm1676, %v1650, %v1172
        %v1684 = vsel %vm1676, %v1651, %v1174
        %v1685 = vsel %vm1676, %v1652, %v1176
        %v1686 = vsel %vm1676, %v1653, %v1178
        %v1687 = vsel %vm1676, %v1654, %v1180
        %v1688 = vsel %vm1676, %v1655, %v1182
        %v1689 = vsel %vm1676, %v1656, %v1184
        %v1690 = vsel %vm1676, %v1657, %v1186
        %v1691 = vsel %vm1676, %v1658, %v1188
        %v1692 = vsel %vm1676, %v1659, %v1190
        %v1693 = vsel %vm1676, %v1660, %v1192
        %v1694 = vsel %vm1676, %v1661, %v1194
        %v1695 = vsel %vm1676, %v1662, %v1196
        %v1696 = vsel %vm1676, %v1663, %v1198
        %v1697 = vsel %vm1676, %v1664, %v1200
        %v1698 = vsel %vm1676, %v1665, %v1202
        %v1699 = vsel %vm1676, %v1666, %v1204
        %v1700 = vsel %vm1676, %v1667, %v1206
        %v1701 = vsel %vm1676, %v1668, %v1208
        %v1702 = vsel %vm1676, %v1669, %v1210
        %v1703 = vsel %vm1676, %v1670, %v1212
        %v1704 = vsel %vm1676, %v1671, %v1214
        %v1705 = vsel %vm1676, %v1672, %v1216
        %v1706 = vsel %vm1676, %v1673, %v1218
        %v1707 = vsel %vm1676, %v1674, %v1220
        %v1708 = vsel %vm1676, %v1675, %v1222
        %vm1709 = vcmask 171008
        %v1710 = vsel %vm1709, %v1677, %v1288
        %v1711 = vsel %vm1709, %v1678, %v1290
        %v1712 = vsel %vm1709, %v1679, %v1292
        %v1713 = vsel %vm1709, %v1680, %v1294
        %v1714 = vsel %vm1709, %v1681, %v1296
        %v1715 = vsel %vm1709, %v1682, %v1298
        %v1716 = vsel %vm1709, %v1683, %v1300
        %v1717 = vsel %vm1709, %v1684, %v1302
        %v1718 = vsel %vm1709, %v1685, %v1304
        %v1719 = vsel %vm1709, %v1686, %v1306
        %v1720 = vsel %vm1709, %v1687, %v1308
        %v1721 = vsel %vm1709, %v1688, %v1310
        %v1722 = vsel %vm1709, %v1689, %v1312
        %v1723 = vsel %vm1709, %v1690, %v1314
        %v1724 = vsel %vm1709, %v1691, %v1316
        %v1725 = vsel %vm1709, %v1692, %v1318
        %v1726 = vsel %vm1709, %v1693, %v1320
        %v1727 = vsel %vm1709, %v1694, %v1322
        %v1728 = vsel %vm1709, %v1695, %v1324
        %v1729 = vsel %vm1709, %v1696, %v1326
        %v1730 = vsel %vm1709, %v1697, %v1328
        %v1731 = vsel %vm1709, %v1698, %v1330
        %v1732 = vsel %vm1709, %v1699, %v1332
        %v1733 = vsel %vm1709, %v1700, %v1334
        %v1734 = vsel %vm1709, %v1701, %v1336
        %v1735 = vsel %vm1709, %v1702, %v1338
        %v1736 = vsel %vm1709, %v1703, %v1340
        %v1737 = vsel %vm1709, %v1704, %v1342
        %v1738 = vsel %vm1709, %v1705, %v1344
        %v1739 = vsel %vm1709, %v1706, %v1346
        %v1740 = vsel %vm1709, %v1707, %v1348
        %v1741 = vsel %vm1709, %v1708, %v1350
        %vm1742 = vcmask 195584
        %v1743 = vsel %vm1742, %v1710, %v1416
        %v1744 = vsel %vm1742, %v1711, %v1418
        %v1745 = vsel %vm1742, %v1712, %v1420
        %v1746 = vsel %vm1742, %v1713, %v1422
        %v1747 = vsel %vm1742, %v1714, %v1424
        %v1748 = vsel %vm1742, %v1715, %v1426
        %v1749 = vsel %vm1742, %v1716, %v1428
        %v1750 = vsel %vm1742, %v1717, %v1430
        %v1751 = vsel %vm1742, %v1718, %v1432
        %v1752 = vsel %vm1742, %v1719, %v1434
        %v1753 = vsel %vm1742, %v1720, %v1436
        %v1754 = vsel %vm1742, %v1721, %v1438
        %v1755 = vsel %vm1742, %v1722, %v1440
        %v1756 = vsel %vm1742, %v1723, %v1442
        %v1757 = vsel %vm1742, %v1724, %v1444
        %v1758 = vsel %vm1742, %v1725, %v1446
        %v1759 = vsel %vm1742, %v1726, %v1448
        %v1760 = vsel %vm1742, %v1727, %v1450
        %v1761 = vsel %vm1742, %v1728, %v1452
        %v1762 = vsel %vm1742, %v1729, %v1454
        %v1763 = vsel %vm1742, %v1730, %v1456
        %v1764 = vsel %vm1742, %v1731, %v1458
        %v1765 = vsel %vm1742, %v1732, %v1460
        %v1766 = vsel %vm1742, %v1733, %v1462
        %v1767 = vsel %vm1742, %v1734, %v1464
        %v1768 = vsel %vm1742, %v1735, %v1466
        %v1769 = vsel %vm1742, %v1736, %v1468
        %v1770 = vsel %vm1742, %v1737, %v1470
        %v1771 = vsel %vm1742, %v1738, %v1472
        %v1772 = vsel %vm1742, %v1739, %v1474
        %v1773 = vsel %vm1742, %v1740, %v1476
        %v1774 = vsel %vm1742, %v1741, %v1478
        %v1775 = vpack.c.bf16 %v1744, %v1743
        %v1776 = vpack.c.bf16 %v1746, %v1745
        %v1777 = vpack.c.bf16 %v1748, %v1747
        %v1778 = vpack.c.bf16 %v1750, %v1749
        %v1779 = vpack.c.bf16 %v1752, %v1751
        %v1780 = vpack.c.bf16 %v1754, %v1753
        %v1781 = vpack.c.bf16 %v1756, %v1755
        %v1782 = vpack.c.bf16 %v1758, %v1757
        %v1783 = vpack.c.bf16 %v1760, %v1759
        %v1784 = vpack.c.bf16 %v1762, %v1761
        %v1785 = vpack.c.bf16 %v1764, %v1763
        %v1786 = vpack.c.bf16 %v1766, %v1765
        %v1787 = vpack.c.bf16 %v1768, %v1767
        %v1788 = vpack.c.bf16 %v1770, %v1769
        %v1789 = vpack.c.bf16 %v1772, %v1771
        %v1790 = vpack.c.bf16 %v1774, %v1773
        %v1791 = vld [vmem:[%s1] sm:$0xf]
        %v1792 = vld [vmem:[%s1 + $0x4] sm:$0xf]
        %v1793 = vld [vmem:[%s1 + $0x8] sm:$0xf]
        %v1794 = vld [vmem:[%s1 + $0xc] sm:$0x3]
        %v1799 = vunpack.c.l.b16 %v1791
        %v1800 = vunpack.c.l.b16 %v1792
        %v1801 = vunpack.c.l.b16 %v1793
        %v1802 = vunpack.c.l.b16 %v1794
        %v1803 = vpack.c.b16 %v1800, %v1799
        %v1804 = vpack.c.b16 %v1802, %v1801
        %vm1806 = vcmask 220160
        %v1808 = vsel %vm1806, %v1775, 0
        %v1811 = vsel %vm1806, %v1776, 0
        %v1814 = vsel %vm1806, %v1777, 0
        %v1817 = vsel %vm1806, %v1778, 0
        %v1820 = vsel %vm1806, %v1779, 0
        %v1823 = vsel %vm1806, %v1780, 0
        %v1826 = vsel %vm1806, %v1781, 0
        %v1829 = vsel %vm1806, %v1782, 0
        %v1832 = vsel %vm1806, %v1783, 0
        %v1835 = vsel %vm1806, %v1784, 0
        %v1838 = vsel %vm1806, %v1785, 0
        %v1841 = vsel %vm1806, %v1786, 0
        %v1844 = vsel %vm1806, %v1787, 0
        %v1847 = vsel %vm1806, %v1788, 0
        %v1850 = vsel %vm1806, %v1789, 0
        %v1853 = vsel %vm1806, %v1790, 0
        %vm1855 = vcmask 1044480
        %vm1856 = vcmask 1045504
        %v1857 = vsel %vm1855, 4294967295, 65535
        %v1858 = vsel %vm1856, %v1857, 0
        %v1860 = vand.u32 %v1804, %v1858
        %1862 = vmatprep.subr.bf16.mxu0 0
        %1863 = vmatpush1.bf16.msra.mxu0 %v1803
        %1864 = vmatprep.subr.bf16.mxu0 0
        %1865 = vmatpush1.bf16.msra.mxu0 %v1860
        %1866 = vmatprep.subr.bf16.mxu0 0
        %1867 = vmatpush1.bf16.msra.mxu0 0
        %1868 = vmatprep.subr.bf16.mxu0 0
        %1869 = vmatpush1.bf16.msra.mxu0 0
        %1870 = vmatprep.subr.bf16.mxu0 0
        %1871 = vmatpush1.bf16.msra.mxu0 0
        %1872 = vmatprep.subr.bf16.mxu0 0
        %1873 = vmatpush1.bf16.msra.mxu0 0
        %1874 = vmatprep.subr.bf16.mxu0 0
        %1875 = vmatpush1.bf16.msra.mxu0 0
        %1876 = vmatprep.subr.bf16.mxu0 0
        %1877 = vmatpush1.bf16.msra.mxu0 0
        %1878 = vmatprep.subr.bf16.mxu0 0
        %1879 = vmatpush1.bf16.msra.mxu0 0
        %1880 = vmatprep.subr.bf16.mxu0 0
        %1881 = vmatpush1.bf16.msra.mxu0 0
        %1882 = vmatprep.subr.bf16.mxu0 0
        %1883 = vmatpush1.bf16.msra.mxu0 0
        %1884 = vmatprep.subr.bf16.mxu0 0
        %1885 = vmatpush1.bf16.msra.mxu0 0
        %1886 = vmatprep.subr.bf16.mxu0 0
        %1887 = vmatpush1.bf16.msra.mxu0 0
        %1888 = vmatprep.subr.bf16.mxu0 0
        %1889 = vmatpush1.bf16.msra.mxu0 0
        %1890 = vmatprep.subr.bf16.mxu0 0
        %1891 = vmatpush1.bf16.msra.mxu0 0
        %1892 = vmatprep.subr.bf16.mxu0 0
        %1893 = vmatpush1.bf16.msra.mxu0 0
        %1894 = vmatprep.mubr.bf16.mxu0 0
        %1895 = vmatmul.mubr.bf16.gmra.mrb[0].mxu0 %v1808
        %v1896 = vpop.f32.mrb[0].mxu0
        %v1897 = vadd.f32 0.0, %v1896
        %v1898 = vpop.f32.mrb[0].mxu0
        %v1899 = vpop.f32.mrb[0].mxu0
        %v1900 = vadd.f32 0.0, %v1899
        %v1901 = vpop.f32.mrb[0].mxu0
        %1902 = vmatprep.mubr.bf16.mxu0 0
        %1903 = vmatmul.mubr.bf16.gmra.mrb[0].mxu0 %v1811
        %v1904 = vpop.f32.mrb[0].mxu0
        %v1905 = vadd.f32 0.0, %v1904
        %v1906 = vpop.f32.mrb[0].mxu0
        %v1907 = vpop.f32.mrb[0].mxu0
        %v1908 = vadd.f32 0.0, %v1907
        %v1909 = vpop.f32.mrb[0].mxu0
        %1910 = vmatprep.mubr.bf16.mxu0 0
        %1911 = vmatmul.mubr.bf16.gmra.mrb[0].mxu0 %v1814
        %v1912 = vpop.f32.mrb[0].mxu0
        %v1913 = vadd.f32 0.0, %v1912
        %v1914 = vpop.f32.mrb[0].mxu0
        %v1915 = vpop.f32.mrb[0].mxu0
        %v1916 = vadd.f32 0.0, %v1915
        %v1917 = vpop.f32.mrb[0].mxu0
        %1918 = vmatprep.mubr.bf16.mxu0 0
        %1919 = vmatmul.mubr.bf16.gmra.mrb[0].mxu0 %v1817
        %v1920 = vpop.f32.mrb[0].mxu0
        %v1921 = vadd.f32 0.0, %v1920
        %v1922 = vpop.f32.mrb[0].mxu0
        %v1923 = vpop.f32.mrb[0].mxu0
        %v1924 = vadd.f32 0.0, %v1923
        %v1925 = vpop.f32.mrb[0].mxu0
        %1926 = vmatprep.mubr.bf16.mxu0 0
        %1927 = vmatmul.mubr.bf16.gmra.mrb[0].mxu0 %v1820
        %v1928 = vpop.f32.mrb[0].mxu0
        %v1929 = vadd.f32 0.0, %v1928
        %v1930 = vpop.f32.mrb[0].mxu0
        %v1931 = vpop.f32.mrb[0].mxu0
        %v1932 = vadd.f32 0.0, %v1931
        %v1933 = vpop.f32.mrb[0].mxu0
        %1934 = vmatprep.mubr.bf16.mxu0 0
        %1935 = vmatmul.mubr.bf16.gmra.mrb[0].mxu0 %v1823
        %v1936 = vpop.f32.mrb[0].mxu0
        %v1937 = vadd.f32 0.0, %v1936
        %v1938 = vpop.f32.mrb[0].mxu0
        %v1939 = vpop.f32.mrb[0].mxu0
        %v1940 = vadd.f32 0.0, %v1939
        %v1941 = vpop.f32.mrb[0].mxu0
        %1942 = vmatprep.mubr.bf16.mxu0 0
        %1943 = vmatmul.mubr.bf16.gmra.mrb[0].mxu0 %v1826
        %v1944 = vpop.f32.mrb[0].mxu0
        %v1945 = vadd.f32 0.0, %v1944
        %v1946 = vpop.f32.mrb[0].mxu0
        %v1947 = vpop.f32.mrb[0].mxu0
        %v1948 = vadd.f32 0.0, %v1947
        %v1949 = vpop.f32.mrb[0].mxu0
        %1950 = vmatprep.mubr.bf16.mxu0 0
        %1951 = vmatmul.mubr.bf16.gmra.mrb[0].mxu0 %v1829
        %v1952 = vpop.f32.mrb[0].mxu0
        %v1953 = vadd.f32 0.0, %v1952
        %v1954 = vpop.f32.mrb[0].mxu0
        %v1955 = vpop.f32.mrb[0].mxu0
        %v1956 = vadd.f32 0.0, %v1955
        %v1957 = vpop.f32.mrb[0].mxu0
        %1958 = vmatprep.mubr.bf16.mxu0 0
        %1959 = vmatmul.mubr.bf16.gmra.mrb[0].mxu0 %v1832
        %v1960 = vpop.f32.mrb[0].mxu0
        %v1961 = vadd.f32 0.0, %v1960
        %v1962 = vpop.f32.mrb[0].mxu0
        %v1963 = vpop.f32.mrb[0].mxu0
        %v1964 = vadd.f32 0.0, %v1963
        %v1965 = vpop.f32.mrb[0].mxu0
        %1966 = vmatprep.mubr.bf16.mxu0 0
        %1967 = vmatmul.mubr.bf16.gmra.mrb[0].mxu0 %v1835
        %v1968 = vpop.f32.mrb[0].mxu0
        %v1969 = vadd.f32 0.0, %v1968
        %v1970 = vpop.f32.mrb[0].mxu0
        %v1971 = vpop.f32.mrb[0].mxu0
        %v1972 = vadd.f32 0.0, %v1971
        %v1973 = vpop.f32.mrb[0].mxu0
        %1974 = vmatprep.mubr.bf16.mxu0 0
        %1975 = vmatmul.mubr.bf16.gmra.mrb[0].mxu0 %v1838
        %v1976 = vpop.f32.mrb[0].mxu0
        %v1977 = vadd.f32 0.0, %v1976
        %v1978 = vpop.f32.mrb[0].mxu0
        %v1979 = vpop.f32.mrb[0].mxu0
        %v1980 = vadd.f32 0.0, %v1979
        %v1981 = vpop.f32.mrb[0].mxu0
        %1982 = vmatprep.mubr.bf16.mxu0 0
        %1983 = vmatmul.mubr.bf16.gmra.mrb[0].mxu0 %v1841
        %v1984 = vpop.f32.mrb[0].mxu0
        %v1985 = vadd.f32 0.0, %v1984
        %v1986 = vpop.f32.mrb[0].mxu0
        %v1987 = vpop.f32.mrb[0].mxu0
        %v1988 = vadd.f32 0.0, %v1987
        %v1989 = vpop.f32.mrb[0].mxu0
        %1990 = vmatprep.mubr.bf16.mxu0 0
        %1991 = vmatmul.mubr.bf16.gmra.mrb[0].mxu0 %v1844
        %v1992 = vpop.f32.mrb[0].mxu0
        %v1993 = vadd.f32 0.0, %v1992
        %v1994 = vpop.f32.mrb[0].mxu0
        %v1995 = vpop.f32.mrb[0].mxu0
        %v1996 = vadd.f32 0.0, %v1995
        %v1997 = vpop.f32.mrb[0].mxu0
        %1998 = vmatprep.mubr.bf16.mxu0 0
        %1999 = vmatmul.mubr.bf16.gmra.mrb[0].mxu0 %v1847
        %v2000 = vpop.f32.mrb[0].mxu0
        %v2001 = vadd.f32 0.0, %v2000
        %v2002 = vpop.f32.mrb[0].mxu0
        %v2003 = vpop.f32.mrb[0].mxu0
        %v2004 = vadd.f32 0.0, %v2003
        %v2005 = vpop.f32.mrb[0].mxu0
        %2006 = vmatprep.mubr.bf16.mxu0 0
        %2007 = vmatmul.mubr.bf16.gmra.mrb[0].mxu0 %v1850
        %v2008 = vpop.f32.mrb[0].mxu0
        %v2009 = vadd.f32 0.0, %v2008
        %v2010 = vpop.f32.mrb[0].mxu0
        %v2011 = vpop.f32.mrb[0].mxu0
        %v2012 = vadd.f32 0.0, %v2011
        %v2013 = vpop.f32.mrb[0].mxu0
        %2014 = vmatprep.mubr.bf16.mxu0 0
        %2015 = vmatmul.mubr.bf16.gmra.mrb[0].mxu0 %v1853
        %v2016 = vpop.f32.mrb[0].mxu0
        %v2017 = vadd.f32 0.0, %v2016
        %v2018 = vpop.f32.mrb[0].mxu0
        %v2019 = vpop.f32.mrb[0].mxu0
        %v2020 = vadd.f32 0.0, %v2019
        %v2021 = vpop.f32.mrb[0].mxu0
        %2022 = vdwg.mxu0
        %v2023 = vld [vmem:[%s2] sm:$0x1]
        %v2025 = vlaneseq
        %v2026 = vshrl.u32 %v2025, 7
        %v2027 = vsub.s32 0, %v2026
        %v2028 = vrot.slane %v2023, %v2027
        %v2030 = vmul.f32 %v1897, %v2028
        %v2031 = vmul.f32 %v1900, %v2028
        %v2032 = vmul.f32 %v1905, %v2028
        %v2033 = vmul.f32 %v1908, %v2028
        %v2034 = vmul.f32 %v1913, %v2028
        %v2035 = vmul.f32 %v1916, %v2028
        %v2036 = vmul.f32 %v1921, %v2028
        %v2037 = vmul.f32 %v1924, %v2028
        %v2038 = vmul.f32 %v1929, %v2028
        %v2039 = vmul.f32 %v1932, %v2028
        %v2040 = vmul.f32 %v1937, %v2028
        %v2041 = vmul.f32 %v1940, %v2028
        %v2042 = vmul.f32 %v1945, %v2028
        %v2043 = vmul.f32 %v1948, %v2028
        %v2044 = vmul.f32 %v1953, %v2028
        %v2045 = vmul.f32 %v1956, %v2028
        %v2046 = vmul.f32 %v1961, %v2028
        %v2047 = vmul.f32 %v1964, %v2028
        %v2048 = vmul.f32 %v1969, %v2028
        %v2049 = vmul.f32 %v1972, %v2028
        %v2050 = vmul.f32 %v1977, %v2028
        %v2051 = vmul.f32 %v1980, %v2028
        %v2052 = vmul.f32 %v1985, %v2028
        %v2053 = vmul.f32 %v1988, %v2028
        %v2054 = vmul.f32 %v1993, %v2028
        %v2055 = vmul.f32 %v1996, %v2028
        %v2056 = vmul.f32 %v2001, %v2028
        %v2057 = vmul.f32 %v2004, %v2028
        %v2058 = vmul.f32 %v2009, %v2028
        %v2059 = vmul.f32 %v2012, %v2028
        %v2060 = vmul.f32 %v2017, %v2028
        %v2061 = vmul.f32 %v2020, %v2028
        %v2062 = vld [vmem:[%s3] sm:$0x1]
        %v2064 = vlaneseq
        %v2065 = vshrl.u32 %v2064, 7
        %v2066 = vsub.s32 0, %v2065
        %v2067 = vrot.slane %v2062, %v2066
        %v2069 = vadd.f32 %v2030, %v2067
        %v2070 = vadd.f32 %v2031, %v2067
        %v2071 = vadd.f32 %v2032, %v2067
        %v2072 = vadd.f32 %v2033, %v2067
        %v2073 = vadd.f32 %v2034, %v2067
        %v2074 = vadd.f32 %v2035, %v2067
        %v2075 = vadd.f32 %v2036, %v2067
        %v2076 = vadd.f32 %v2037, %v2067
        %v2077 = vadd.f32 %v2038, %v2067
        %v2078 = vadd.f32 %v2039, %v2067
        %v2079 = vadd.f32 %v2040, %v2067
        %v2080 = vadd.f32 %v2041, %v2067
        %v2081 = vadd.f32 %v2042, %v2067
        %v2082 = vadd.f32 %v2043, %v2067
        %v2083 = vadd.f32 %v2044, %v2067
        %v2084 = vadd.f32 %v2045, %v2067
        %v2085 = vadd.f32 %v2046, %v2067
        %v2086 = vadd.f32 %v2047, %v2067
        %v2087 = vadd.f32 %v2048, %v2067
        %v2088 = vadd.f32 %v2049, %v2067
        %v2089 = vadd.f32 %v2050, %v2067
        %v2090 = vadd.f32 %v2051, %v2067
        %v2091 = vadd.f32 %v2052, %v2067
        %v2092 = vadd.f32 %v2053, %v2067
        %v2093 = vadd.f32 %v2054, %v2067
        %v2094 = vadd.f32 %v2055, %v2067
        %v2095 = vadd.f32 %v2056, %v2067
        %v2096 = vadd.f32 %v2057, %v2067
        %v2097 = vadd.f32 %v2058, %v2067
        %v2098 = vadd.f32 %v2059, %v2067
        %v2099 = vadd.f32 %v2060, %v2067
        %v2100 = vadd.f32 %v2061, %v2067
        %v2101 = vmax.f32 %v2069, 0.0
        %v2102 = vmax.f32 %v2070, 0.0
        %v2103 = vmax.f32 %v2071, 0.0
        %v2104 = vmax.f32 %v2072, 0.0
        %v2105 = vmax.f32 %v2073, 0.0
        %v2106 = vmax.f32 %v2074, 0.0
        %v2107 = vmax.f32 %v2075, 0.0
        %v2108 = vmax.f32 %v2076, 0.0
        %v2109 = vmax.f32 %v2077, 0.0
        %v2110 = vmax.f32 %v2078, 0.0
        %v2111 = vmax.f32 %v2079, 0.0
        %v2112 = vmax.f32 %v2080, 0.0
        %v2113 = vmax.f32 %v2081, 0.0
        %v2114 = vmax.f32 %v2082, 0.0
        %v2115 = vmax.f32 %v2083, 0.0
        %v2116 = vmax.f32 %v2084, 0.0
        %v2117 = vmax.f32 %v2085, 0.0
        %v2118 = vmax.f32 %v2086, 0.0
        %v2119 = vmax.f32 %v2087, 0.0
        %v2120 = vmax.f32 %v2088, 0.0
        %v2121 = vmax.f32 %v2089, 0.0
        %v2122 = vmax.f32 %v2090, 0.0
        %v2123 = vmax.f32 %v2091, 0.0
        %v2124 = vmax.f32 %v2092, 0.0
        %v2125 = vmax.f32 %v2093, 0.0
        %v2126 = vmax.f32 %v2094, 0.0
        %v2127 = vmax.f32 %v2095, 0.0
        %v2128 = vmax.f32 %v2096, 0.0
        %v2129 = vmax.f32 %v2097, 0.0
        %v2130 = vmax.f32 %v2098, 0.0
        %v2131 = vmax.f32 %v2099, 0.0
        %v2132 = vmax.f32 %v2100, 0.0
        %2133 = vst [vmem:[%s190] sm:$0xff] %v2101
        %2134 = vst [vmem:[%s190 + $0x8] sm:$0xff] %v2102
        %2135 = vst [vmem:[%s190 + $0x10] sm:$0xff] %v2103
        %2136 = vst [vmem:[%s190 + $0x18] sm:$0xff] %v2104
        %2137 = vst [vmem:[%s190 + $0x20] sm:$0xff] %v2105
        %2138 = vst [vmem:[%s190 + $0x28] sm:$0xff] %v2106
        %2139 = vst [vmem:[%s190 + $0x30] sm:$0xff] %v2107
        %2140 = vst [vmem:[%s190 + $0x38] sm:$0xff] %v2108
        %2141 = vst [vmem:[%s190 + $0x40] sm:$0xff] %v2109
        %2142 = vst [vmem:[%s190 + $0x48] sm:$0xff] %v2110
        %2143 = vst [vmem:[%s190 + $0x50] sm:$0xff] %v2111
        %2144 = vst [vmem:[%s190 + $0x58] sm:$0xff] %v2112
        %2145 = vst [vmem:[%s190 + $0x60] sm:$0xff] %v2113
        %2146 = vst [vmem:[%s190 + $0x68] sm:$0xff] %v2114
        %2147 = vst [vmem:[%s190 + $0x70] sm:$0xff] %v2115
        %2148 = vst [vmem:[%s190 + $0x78] sm:$0xff] %v2116
        %2149 = vst [vmem:[%s190 + $0x80] sm:$0xff] %v2117
        %2150 = vst [vmem:[%s190 + $0x88] sm:$0xff] %v2118
        %2151 = vst [vmem:[%s190 + $0x90] sm:$0xff] %v2119
        %2152 = vst [vmem:[%s190 + $0x98] sm:$0xff] %v2120
        %2153 = vst [vmem:[%s190 + $0xa0] sm:$0xff] %v2121
        %2154 = vst [vmem:[%s190 + $0xa8] sm:$0xff] %v2122
        %2155 = vst [vmem:[%s190 + $0xb0] sm:$0xff] %v2123
        %2156 = vst [vmem:[%s190 + $0xb8] sm:$0xff] %v2124
        %2157 = vst [vmem:[%s190 + $0xc0] sm:$0xff] %v2125
        %2158 = vst [vmem:[%s190 + $0xc8] sm:$0xff] %v2126
        %2159 = vst [vmem:[%s190 + $0xd0] sm:$0xff] %v2127
        %2160 = vst [vmem:[%s190 + $0xd8] sm:$0xff] %v2128
        %2161 = vst [vmem:[%s190 + $0xe0] sm:$0xff] %v2129
        %2162 = vst [vmem:[%s190 + $0xe8] sm:$0xff] %v2130
        %2163 = vst [vmem:[%s190 + $0xf0] sm:$0xff] %v2131
        %2164 = vst [vmem:[%s190 + $0xf8] sm:$0xff] %v2132
        %s2165 = sand.u32 %s115, 1
        %s2166 = scalar_lea.sflag [#allocation3], %s2165
        %s2167 = sand.u32 %s115, 1
        %s2168 = smul.addr %s2167, 256
        %s2169 = scalar_lea.vmem [#allocation2], %s2168
        // Predicated region
        $region37: #{tpu_custom_call.1} parent=35 // pred_check
          %p2170 = pneg %p125
        $region38: #{tpu_custom_call.1} parent=35 // pred_check_branch
          %2172 = sbr.rel (%p2170) target = $region40
        $region39: #{tpu_custom_call.1} parent=35 // pred_region
          %s2174 = ssub.s32 4096, 4096
          %2175 = vsyncadd %s2166, %s2174
          %s2176 = smul.addr %s18, 32
          %s2177 = smul.addr %s2176, 128
          %s2178 = scalar_lea.hbm %s4, %s2177
          %s2179 = sshll.u32 %s2169, 4
          %s2180 = int_to_ptr.vmem [resolvable:$true] %s2179
          %2185 = dma.vmem_to_hbm [thread:$0]  %s2180, 4096, %s2178, %s2166, 128, 128, 8
        $region40: #{tpu_custom_call.1} parent=35 // pred_fallthru
          _
      $region36: #{tpu_custom_call.1} parent=5 // pred_fallthru
        _
      %p2186 = scmp.le.s32.totalorder 2, %s13
      // Predicated region
      $region41: #{tpu_custom_call.1} parent=5 // pred_check
        %p2187 = pneg %p2186
      $region42: #{tpu_custom_call.1} parent=5 // pred_check_branch
        %2189 = sbr.rel (%p2187) target = $region44
      $region43: #{tpu_custom_call.1} parent=5 // pred_region
        %s2190 = ssub.s32 %s13, 2
        // Predicated region
        $region45: #{tpu_custom_call.1} parent=43 // pred_check
          %p2191 = pneg %p131
        $region46: #{tpu_custom_call.1} parent=43 // pred_check_branch
          %2193 = sbr.rel (%p2191) target = $region48
        $region47: #{tpu_custom_call.1} parent=43 // pred_region
          %s2194 = sand.u32 %s116, 1
          %s2195 = scalar_lea.sflag [#allocation3], %s2194
          %s2196 = sand.u32 %s116, 1
          %s2197 = smul.addr %s2196, 256
          %s2198 = scalar_lea.vmem [#allocation2], %s2197
          %2199 = dma.done %s2195, 4096
        $region48: #{tpu_custom_call.1} parent=43 // pred_fallthru
          _
      $region44: #{tpu_custom_call.1} parent=5 // pred_fallthru
        _
    $region6: #{tpu_custom_call.1} parent=1 // loop_footer
      %s17 = sadd.s32 1, %s13
    $region7: #{tpu_custom_call.1} parent=1 // loop_footer_branch
      %12 = sbr.rel target = $region3
    $region8: #{tpu_custom_call.1} parent=1 // loop_exit
      _
    %2200 = vsyncpa [#allocation3], 1
    %s2201 = scalar_lea.sflag [#allocation3], 1
    %2202 = vsyncpa %s2201, 1

</llo_original>
